<compile_context>
chip_gen: v7x
topology: tpu7x:2x2x1
jax: 0.10.0
libtpu: 0.0.40
codegen_flags: <defaults>
</compile_context>

<pallas_src>
import math
from functools import partial

import jax
import jax.numpy as jnp
from jax import lax
from jax.experimental import pallas as pl
from jax.experimental.pallas import tpu as pltpu  # noqa: F401  (kept for TPU-specific tuning hooks)


# ----------------------------- fused Pallas kernel ------------------------------

def _bert_kernel(emb_ref, bidc_ref, bidr_ref, kval_ref, hmask_ref,
                 eg_ref, ebt_ref,
                 wqkv_ref, bqkv_ref, wo_ref, bo_ref, ln1g_ref, ln1b_ref,
                 w1_ref, b1_ref, w2_ref, b2_ref, ln2g_ref, ln2b_ref,
                 wp_ref, bp_ref, wc_ref, bc_ref,
                 out_ref, *, num_layers, num_heads, hidden, eps):
    """Whole BERT forward (post-embedding-sum) in one kernel invocation.

    emb_ref:   (M, H)   summed word+pos+type embeddings (f32)
    bidc_ref:  (M, 1)   batch id per query row
    bidr_ref:  (1, M)   batch id per key column
    kval_ref:  (1, M)   key-validity (attention mask) per key column
    hmask_ref: (nH,1,H) per-head hidden-column selector (1.0 on that head's columns)
    out_ref:   (M, 128) per-token logits, zero-padded to 128 lanes (CLS rows picked outside)
    """
    H = hidden

    def mmb(a_bf16, w_bf16):
        # bf16 MXU operands, f32 accumulation.
        return jnp.dot(a_bf16, w_bf16, preferred_element_type=jnp.float32)

    def layer_norm(x, g, b):
        mu = jnp.mean(x, axis=-1, keepdims=True)
        xc = x - mu
        var = jnp.mean(xc * xc, axis=-1, keepdims=True)
        return xc * lax.rsqrt(var + eps) * g + b

    def gelu(x):
        # tanh-approx GELU (f32 on VPU/EUP).
        # TODO(synk): switch to exact erf-based GELU (HF default) once lax.erf lowering is guaranteed.
        return 0.5 * x * (1.0 + jnp.tanh(0.7978845608028654 * (x + 0.044715 * x * x * x)))

    # Additive attention bias built in-kernel from 1-D descriptors (a few VPU compares);
    # avoids materializing / DMA'ing an O(M^2) f32 input.
    same_batch = bidc_ref[...] == bidr_ref[...]                  # (M, M)
    key_valid = kval_ref[...] > 0.5                              # (1, M)
    bias = jnp.where(same_batch & key_valid, 0.0, -10000.0)      # (M, M) f32

    hmask = hmask_ref[...]                                       # (nH, 1, H)

    x0 = layer_norm(emb_ref[...], eg_ref[...], ebt_ref[...])     # (M, H) f32

    def layer(l, x):
        xb = x.astype(jnp.bfloat16)                              # cast once per layer
        # Fused QKV projection: one MXU push + one bias add. 1/sqrt(Dh) already folded into
        # the q-portion of wqkv/bqkv by the wrapper.
        qkv = mmb(xb, wqkv_ref[l]) + bqkv_ref[l]                 # (M, 3H) f32
        q = qkv[:, :H]
        k = qkv[:, H:2 * H]
        v = qkv[:, 2 * H:]

        qb = q.astype(jnp.bfloat16)                              # reused by every head's score dot
        ctx = jnp.zeros_like(x)
        for h in range(num_heads):                               # static unroll over heads (tiny)
            hm = hmask[h]                                        # (1, H) head-column selector
            kh = (k * hm).astype(jnp.bfloat16)                   # mask only ONE score operand
            s = lax.dot_general(qb, kh, (((1,), (1,)), ((), ())),
                                preferred_element_type=jnp.float32)
            s = s + bias                                         # cross-batch / padded keys killed here
            s = s - jnp.max(s, axis=-1, keepdims=True)
            p = jnp.exp(s)
            p = p * pl.reciprocal(jnp.sum(p, axis=-1, keepdims=True), approx=True)
            # contribution lands in head h's hidden columns
            ctx = ctx + mmb(p.astype(jnp.bfloat16), (v * hm).astype(jnp.bfloat16))

        attn = mmb(ctx.astype(jnp.bfloat16), wo_ref[l]) + bo_ref[l]
        x = layer_norm(attn + x, ln1g_ref[l], ln1b_ref[l])

        hdn = gelu(mmb(x.astype(jnp.bfloat16), w1_ref[l]) + b1_ref[l])
        ffn = mmb(hdn.astype(jnp.bfloat16), w2_ref[l]) + b2_ref[l]
        return layer_norm(ffn + x, ln2g_ref[l], ln2b_ref[l])

    x = lax.fori_loop(0, num_layers, layer, x0, unroll=True)

    # Pooler (tanh) + classifier computed for every row (cheaper than an in-kernel row gather);
    # classifier padded to 128 output lanes -> single lane-dense unmasked store.
    pooled = jnp.tanh(mmb(x.astype(jnp.bfloat16), wp_ref[...]) + bp_ref[...])
    out_ref[...] = mmb(pooled.astype(jnp.bfloat16), wc_ref[...]) + bc_ref[...]


# ----------------------------- Model definition -----------------------------

CFG = dict(
    vocab_size=100,
    hidden=32,
    num_heads=4,
    head_dim=8,
    intermediate=64,
    num_layers=2,
    max_pos=16,
    type_vocab=2,
    num_classes=3,
)

_C_PAD = 128   # lane-dense classifier output width


def init_params(key, cfg):
    H, I, L = cfg["hidden"], cfg["intermediate"], cfg["num_layers"]
    keys = iter(jax.random.split(key, 8 + L * 8))

    def w(shape):
        return (0.02 * jax.random.normal(next(keys), shape)).astype(jnp.float32)

    params = {
        "word_emb": w((cfg["vocab_size"], H)),
        "pos_emb": w((cfg["max_pos"], H)),
        "type_emb": w((cfg["type_vocab"], H)),
        "emb_ln_g": jnp.ones((H,), jnp.float32),
        "emb_ln_b": jnp.zeros((H,), jnp.float32),
        "layers": [],
        "w_pool": w((H, H)), "b_pool": jnp.zeros((H,), jnp.float32),
        "w_cls": w((H, cfg["num_classes"])),
        "b_cls": jnp.zeros((cfg["num_classes"],), jnp.float32),
    }
    for _ in range(L):
        params["layers"].append({
            "wq": w((H, H)), "bq": jnp.zeros((H,), jnp.float32),
            "wk": w((H, H)), "bk": jnp.zeros((H,), jnp.float32),
            "wv": w((H, H)), "bv": jnp.zeros((H,), jnp.float32),
            "wo": w((H, H)), "bo": jnp.zeros((H,), jnp.float32),
            "ln1_g": jnp.ones((H,), jnp.float32), "ln1_b": jnp.zeros((H,), jnp.float32),
            "w1": w((H, I)), "b1": jnp.zeros((I,), jnp.float32),
            "w2": w((I, H)), "b2": jnp.zeros((H,), jnp.float32),
            "ln2_g": jnp.ones((H,), jnp.float32), "ln2_b": jnp.zeros((H,), jnp.float32),
        })
    return params


def bert_forward(params, input_ids, attention_mask, cfg):
    B, S = input_ids.shape
    H, nH, Dh = cfg["hidden"], cfg["num_heads"], cfg["head_dim"]
    L, C = cfg["num_layers"], cfg["num_classes"]
    M = B * S
    scale = 1.0 / math.sqrt(Dh)
    assert S <= cfg["max_pos"], "sequence length exceeds max position embeddings"

    # --- embeddings (gather is glue in plain JAX) ---
    word = jnp.take(params["word_emb"], input_ids, axis=0)          # (B, S, H)
    pos = params["pos_emb"][:S][None, :, :]                         # (1, S, H)
    tok = params["type_emb"][0][None, None, :]                      # token_type_ids = 0
    emb = (word + pos + tok).astype(jnp.float32).reshape(M, H)

    # --- 1-D attention-bias descriptors (bias itself is built in-kernel) ---
    batch_ids = jnp.repeat(jnp.arange(B), S).astype(jnp.float32)    # (M,)
    bid_col = batch_ids.reshape(M, 1)
    bid_row = batch_ids.reshape(1, M)
    key_valid = attention_mask.reshape(1, M).astype(jnp.float32)

    # --- per-head hidden-column selector masks ---
    cols = jnp.arange(H)
    head_mask = ((cols[None, :] // Dh) == jnp.arange(nH)[:, None]).astype(jnp.float32)
    head_mask = head_mask.reshape(nH, 1, H)

    # --- stack per-layer weights; matmul weights pre-cast to bf16 (MXU operand dtype) ---
    bf = lambda a: a.astype(jnp.bfloat16)
    row = lambda a: a.reshape(1, -1)
    stack_bf = lambda name: jnp.stack([bf(lyr[name]) for lyr in params["layers"]])
    rowL = lambda name: jnp.stack([row(lyr[name]) for lyr in params["layers"]])

    # Fused QKV weight/bias; 1/sqrt(Dh) folded into the q-portion (constant fold on weights).
    wqkv = jnp.stack([bf(jnp.concatenate([lyr["wq"] * scale, lyr["wk"], lyr["wv"]], axis=1))
                      for lyr in params["layers"]])                 # (L, H, 3H) bf16
    bqkv = jnp.stack([row(jnp.concatenate([lyr["bq"] * scale, lyr["bk"], lyr["bv"]]))
                      for lyr in params["layers"]])                 # (L, 1, 3H) f32

    # Classifier zero-padded to 128 output lanes for a lane-dense output store.
    wc_pad = jnp.zeros((H, _C_PAD), jnp.float32).at[:, :C].set(params["w_cls"])
    bc_pad = jnp.zeros((1, _C_PAD), jnp.float32).at[:, :C].set(params["b_cls"])

    args = (
        emb, bid_col, bid_row, key_valid, head_mask,
        row(params["emb_ln_g"]), row(params["emb_ln_b"]),
        wqkv, bqkv,
        stack_bf("wo"), rowL("bo"), rowL("ln1_g"), rowL("ln1_b"),
        stack_bf("w1"), rowL("b1"), stack_bf("w2"), rowL("b2"),
        rowL("ln2_g"), rowL("ln2_b"),
        bf(params["w_pool"]), row(params["b_pool"]),
        bf(wc_pad), bc_pad,
    )

    # Single fused pallas_call: no grid, every operand is one full VMEM block (footprint << 1 MiB).
    logits_all = pl.pallas_call(
        partial(_bert_kernel, num_layers=L, num_heads=nH, hidden=H, eps=1e-12),
        out_shape=jax.ShapeDtypeStruct((M, _C_PAD), jnp.float32),
    )(*args)

    # CLS-row + real-class-column selection is trivial XLA glue.
    return logits_all.reshape(B, S, _C_PAD)[:, 0, :C]


# ----------------------------------- main -----------------------------------

if __name__ == "__main__":
    key = jax.random.PRNGKey(0)
    pkey, ikey = jax.random.split(key)

    params = init_params(pkey, CFG)

    B, S = 2, 8
    input_ids = jax.random.randint(ikey, (B, S), 0, CFG["vocab_size"], dtype=jnp.int32)
    attention_mask = jnp.array(
        [[1, 1, 1, 1, 1, 1, 1, 1],
         [1, 1, 1, 1, 1, 0, 0, 0]], dtype=jnp.int32)

    fwd = jax.jit(lambda p, ids, am: bert_forward(p, ids, am, CFG))
    logits = fwd(params, input_ids, attention_mask)
    logits = jax.block_until_ready(logits)

    assert logits.shape == (B, CFG["num_classes"])
    assert bool(jnp.all(jnp.isfinite(logits)))
    print("KERNEL_OK")
</pallas_src>

<mosaic_0001>
module attributes {stable_mosaic.version = 11 : i64} {
  func.func @_bert_kernel(%arg0: memref<16x32xf32, #tpu.memory_space<vmem>>, %arg1: memref<16x1xf32, #tpu.memory_space<vmem>>, %arg2: memref<1x16xf32, #tpu.memory_space<vmem>>, %arg3: memref<1x16xf32, #tpu.memory_space<vmem>>, %arg4: memref<4x1x32xf32, #tpu.memory_space<vmem>>, %arg5: memref<1x32xf32, #tpu.memory_space<vmem>>, %arg6: memref<1x32xf32, #tpu.memory_space<vmem>>, %arg7: memref<2x32x96xbf16, #tpu.memory_space<vmem>>, %arg8: memref<2x1x96xf32, #tpu.memory_space<vmem>>, %arg9: memref<2x32x32xbf16, #tpu.memory_space<vmem>>, %arg10: memref<2x1x32xf32, #tpu.memory_space<vmem>>, %arg11: memref<2x1x32xf32, #tpu.memory_space<vmem>>, %arg12: memref<2x1x32xf32, #tpu.memory_space<vmem>>, %arg13: memref<2x32x64xbf16, #tpu.memory_space<vmem>>, %arg14: memref<2x1x64xf32, #tpu.memory_space<vmem>>, %arg15: memref<2x64x32xbf16, #tpu.memory_space<vmem>>, %arg16: memref<2x1x32xf32, #tpu.memory_space<vmem>>, %arg17: memref<2x1x32xf32, #tpu.memory_space<vmem>>, %arg18: memref<2x1x32xf32, #tpu.memory_space<vmem>>, %arg19: memref<32x32xbf16, #tpu.memory_space<vmem>>, %arg20: memref<1x32xf32, #tpu.memory_space<vmem>>, %arg21: memref<32x128xbf16, #tpu.memory_space<vmem>>, %arg22: memref<1x128xf32, #tpu.memory_space<vmem>>, %arg23: memref<16x128xf32, #tpu.memory_space<vmem>>) attributes {dimension_semantics = [], scalar_prefetch = 0 : i64, scratch_operands = 0 : i64, tpu.core_type = #tpu.core_type<tc>} {
    %c0 = arith.constant 0 : index
    %c0_0 = arith.constant 0 : index
    %0 = vector.load %arg1[%c0, %c0_0] : memref<16x1xf32, #tpu.memory_space<vmem>>, vector<16x1xf32>
    %c0_1 = arith.constant 0 : index
    %c0_2 = arith.constant 0 : index
    %1 = vector.load %arg2[%c0_1, %c0_2] : memref<1x16xf32, #tpu.memory_space<vmem>>, vector<1x16xf32>
    %2 = vector.broadcast %0 : vector<16x1xf32> to vector<16x16xf32>
    %3 = vector.broadcast %1 : vector<1x16xf32> to vector<16x16xf32>
    %4 = arith.cmpf oeq, %2, %3 : vector<16x16xf32>
    %c0_3 = arith.constant 0 : index
    %c0_4 = arith.constant 0 : index
    %5 = vector.load %arg3[%c0_3, %c0_4] : memref<1x16xf32, #tpu.memory_space<vmem>>, vector<1x16xf32>
    %cst = arith.constant 5.000000e-01 : f32
    %6 = vector.broadcast %cst : f32 to vector<1x16xf32>
    %7 = arith.cmpf ogt, %5, %6 : vector<1x16xf32>
    %8 = vector.broadcast %7 : vector<1x16xi1> to vector<16x16xi1>
    %9 = arith.andi %4, %8 : vector<16x16xi1>
    %cst_5 = arith.constant 0.000000e+00 : f32
    %cst_6 = arith.constant -1.000000e+04 : f32
    %10 = vector.broadcast %cst_5 : f32 to vector<16x16xf32>
    %11 = vector.broadcast %cst_6 : f32 to vector<16x16xf32>
    %12 = arith.select %9, %10, %11 : vector<16x16xi1>, vector<16x16xf32>
    %c0_7 = arith.constant 0 : index
    %c0_8 = arith.constant 0 : index
    %c0_9 = arith.constant 0 : index
    %13 = vector.load %arg4[%c0_7, %c0_8, %c0_9] : memref<4x1x32xf32, #tpu.memory_space<vmem>>, vector<4x1x32xf32>
    %c0_10 = arith.constant 0 : index
    %c0_11 = arith.constant 0 : index
    %14 = vector.load %arg0[%c0_10, %c0_11] : memref<16x32xf32, #tpu.memory_space<vmem>>, vector<16x32xf32>
    %c0_12 = arith.constant 0 : index
    %c0_13 = arith.constant 0 : index
    %15 = vector.load %arg5[%c0_12, %c0_13] : memref<1x32xf32, #tpu.memory_space<vmem>>, vector<1x32xf32>
    %c0_14 = arith.constant 0 : index
    %c0_15 = arith.constant 0 : index
    %16 = vector.load %arg6[%c0_14, %c0_15] : memref<1x32xf32, #tpu.memory_space<vmem>>, vector<1x32xf32>
    %cst_16 = arith.constant dense<0.000000e+00> : vector<16xf32>
    %17 = vector.multi_reduction <add>, %14, %cst_16 [1] : vector<16x32xf32> to vector<16xf32>
    %18 = vector.shape_cast %17 : vector<16xf32> to vector<16x1xf32>
    %cst_17 = arith.constant 3.200000e+01 : f32
    %19 = vector.broadcast %cst_17 : f32 to vector<16x1xf32>
    %20 = arith.divf %18, %19 : vector<16x1xf32>
    %21 = vector.broadcast %20 : vector<16x1xf32> to vector<16x32xf32>
    %22 = arith.subf %14, %21 : vector<16x32xf32>
    %23 = arith.mulf %22, %22 : vector<16x32xf32>
    %cst_18 = arith.constant dense<0.000000e+00> : vector<16xf32>
    %24 = vector.multi_reduction <add>, %23, %cst_18 [1] : vector<16x32xf32> to vector<16xf32>
    %25 = vector.shape_cast %24 : vector<16xf32> to vector<16x1xf32>
    %cst_19 = arith.constant 3.200000e+01 : f32
    %26 = vector.broadcast %cst_19 : f32 to vector<16x1xf32>
    %27 = arith.divf %25, %26 : vector<16x1xf32>
    %cst_20 = arith.constant 9.99999996E-13 : f32
    %28 = vector.broadcast %cst_20 : f32 to vector<16x1xf32>
    %29 = arith.addf %27, %28 : vector<16x1xf32>
    %30 = math.rsqrt %29 : vector<16x1xf32>
    %31 = vector.broadcast %30 : vector<16x1xf32> to vector<16x32xf32>
    %32 = arith.mulf %22, %31 : vector<16x32xf32>
    %33 = vector.broadcast %15 : vector<1x32xf32> to vector<16x32xf32>
    %34 = arith.mulf %32, %33 : vector<16x32xf32>
    %35 = vector.broadcast %16 : vector<1x32xf32> to vector<16x32xf32>
    %36 = arith.addf %34, %35 : vector<16x32xf32>
    %c0_i32 = arith.constant 0 : i32
    %37 = arith.truncf %36 : vector<16x32xf32> to vector<16x32xbf16>
    %38 = arith.index_cast %c0_i32 : i32 to index
    %c0_21 = arith.constant 0 : index
    %c0_22 = arith.constant 0 : index
    %39 = vector.load %arg7[%38, %c0_21, %c0_22] : memref<2x32x96xbf16, #tpu.memory_space<vmem>>, vector<1x32x96xbf16>
    %40 = vector.shape_cast %39 : vector<1x32x96xbf16> to vector<32x96xbf16>
    %cst_23 = arith.constant dense<0.000000e+00> : vector<16x96xf32>
    %41 = tpu.matmul %37, %40, %cst_23 {dimension_numbers = #tpu.dot_dimension_numbers<[1], [0], [0], [1], [0, 0, 1, 1], [], []>} : vector<16x32xbf16>, vector<32x96xbf16>, vector<16x96xf32> -> vector<16x96xf32>
    %42 = arith.index_cast %c0_i32 : i32 to index
    %c0_24 = arith.constant 0 : index
    %c0_25 = arith.constant 0 : index
    %43 = vector.load %arg8[%42, %c0_24, %c0_25] : memref<2x1x96xf32, #tpu.memory_space<vmem>>, vector<1x1x96xf32>
    %44 = vector.shape_cast %43 : vector<1x1x96xf32> to vector<1x96xf32>
    %45 = vector.broadcast %44 : vector<1x96xf32> to vector<16x96xf32>
    %46 = arith.addf %41, %45 : vector<16x96xf32>
    %47 = vector.extract_strided_slice %46 {offsets = [0, 0], sizes = [16, 32], strides = [1, 1]} : vector<16x96xf32> to vector<16x32xf32>
    %48 = vector.extract_strided_slice %46 {offsets = [0, 32], sizes = [16, 32], strides = [1, 1]} : vector<16x96xf32> to vector<16x32xf32>
    %49 = vector.extract_strided_slice %46 {offsets = [0, 64], sizes = [16, 32], strides = [1, 1]} : vector<16x96xf32> to vector<16x32xf32>
    %50 = arith.truncf %47 : vector<16x32xf32> to vector<16x32xbf16>
    %cst_26 = arith.constant 0.000000e+00 : f32
    %51 = vector.broadcast %cst_26 : f32 to vector<16x32xf32>
    %52 = vector.extract_strided_slice %13 {offsets = [0, 0, 0], sizes = [1, 1, 32], strides = [1, 1, 1]} : vector<4x1x32xf32> to vector<1x1x32xf32>
    %53 = vector.shape_cast %52 : vector<1x1x32xf32> to vector<1x32xf32>
    %54 = vector.broadcast %53 : vector<1x32xf32> to vector<16x32xf32>
    %55 = arith.mulf %48, %54 : vector<16x32xf32>
    %56 = arith.truncf %55 : vector<16x32xf32> to vector<16x32xbf16>
    %cst_27 = arith.constant dense<0.000000e+00> : vector<16x16xf32>
    %57 = tpu.matmul %50, %56, %cst_27 {dimension_numbers = #tpu.dot_dimension_numbers<[1], [1], [0], [0], [0, 0, 1, 0], [], []>} : vector<16x32xbf16>, vector<16x32xbf16>, vector<16x16xf32> -> vector<16x16xf32>
    %58 = arith.addf %57, %12 : vector<16x16xf32>
    %cst_28 = arith.constant dense<0xFF800000> : vector<16xf32>
    %59 = vector.multi_reduction <maximumf>, %58, %cst_28 [1] : vector<16x16xf32> to vector<16xf32>
    %60 = vector.shape_cast %59 : vector<16xf32> to vector<16x1xf32>
    %61 = vector.broadcast %60 : vector<16x1xf32> to vector<16x16xf32>
    %62 = arith.subf %58, %61 : vector<16x16xf32>
    %63 = math.exp %62 : vector<16x16xf32>
    %cst_29 = arith.constant dense<0.000000e+00> : vector<16xf32>
    %64 = vector.multi_reduction <add>, %63, %cst_29 [1] : vector<16x16xf32> to vector<16xf32>
    %65 = vector.shape_cast %64 : vector<16xf32> to vector<16x1xf32>
    %66 = tpu.reciprocal %65 {approx = true} : vector<16x1xf32> -> vector<16x1xf32>
    %67 = vector.broadcast %66 : vector<16x1xf32> to vector<16x16xf32>
    %68 = arith.mulf %63, %67 : vector<16x16xf32>
    %69 = arith.truncf %68 : vector<16x16xf32> to vector<16x16xbf16>
    %70 = vector.broadcast %53 : vector<1x32xf32> to vector<16x32xf32>
    %71 = arith.mulf %49, %70 : vector<16x32xf32>
    %72 = arith.truncf %71 : vector<16x32xf32> to vector<16x32xbf16>
    %cst_30 = arith.constant dense<0.000000e+00> : vector<16x32xf32>
    %73 = tpu.matmul %69, %72, %cst_30 {dimension_numbers = #tpu.dot_dimension_numbers<[1], [0], [0], [1], [0, 0, 1, 1], [], []>} : vector<16x16xbf16>, vector<16x32xbf16>, vector<16x32xf32> -> vector<16x32xf32>
    %74 = arith.addf %51, %73 : vector<16x32xf32>
    %75 = vector.extract_strided_slice %13 {offsets = [1, 0, 0], sizes = [1, 1, 32], strides = [1, 1, 1]} : vector<4x1x32xf32> to vector<1x1x32xf32>
    %76 = vector.shape_cast %75 : vector<1x1x32xf32> to vector<1x32xf32>
    %77 = vector.broadcast %76 : vector<1x32xf32> to vector<16x32xf32>
    %78 = arith.mulf %48, %77 : vector<16x32xf32>
    %79 = arith.truncf %78 : vector<16x32xf32> to vector<16x32xbf16>
    %cst_31 = arith.constant dense<0.000000e+00> : vector<16x16xf32>
    %80 = tpu.matmul %50, %79, %cst_31 {dimension_numbers = #tpu.dot_dimension_numbers<[1], [1], [0], [0], [0, 0, 1, 0], [], []>} : vector<16x32xbf16>, vector<16x32xbf16>, vector<16x16xf32> -> vector<16x16xf32>
    %81 = arith.addf %80, %12 : vector<16x16xf32>
    %cst_32 = arith.constant dense<0xFF800000> : vector<16xf32>
    %82 = vector.multi_reduction <maximumf>, %81, %cst_32 [1] : vector<16x16xf32> to vector<16xf32>
    %83 = vector.shape_cast %82 : vector<16xf32> to vector<16x1xf32>
    %84 = vector.broadcast %83 : vector<16x1xf32> to vector<16x16xf32>
    %85 = arith.subf %81, %84 : vector<16x16xf32>
    %86 = math.exp %85 : vector<16x16xf32>
    %cst_33 = arith.constant dense<0.000000e+00> : vector<16xf32>
    %87 = vector.multi_reduction <add>, %86, %cst_33 [1] : vector<16x16xf32> to vector<16xf32>
    %88 = vector.shape_cast %87 : vector<16xf32> to vector<16x1xf32>
    %89 = tpu.reciprocal %88 {approx = true} : vector<16x1xf32> -> vector<16x1xf32>
    %90 = vector.broadcast %89 : vector<16x1xf32> to vector<16x16xf32>
    %91 = arith.mulf %86, %90 : vector<16x16xf32>
    %92 = arith.truncf %91 : vector<16x16xf32> to vector<16x16xbf16>
    %93 = vector.broadcast %76 : vector<1x32xf32> to vector<16x32xf32>
    %94 = arith.mulf %49, %93 : vector<16x32xf32>
    %95 = arith.truncf %94 : vector<16x32xf32> to vector<16x32xbf16>
    %cst_34 = arith.constant dense<0.000000e+00> : vector<16x32xf32>
    %96 = tpu.matmul %92, %95, %cst_34 {dimension_numbers = #tpu.dot_dimension_numbers<[1], [0], [0], [1], [0, 0, 1, 1], [], []>} : vector<16x16xbf16>, vector<16x32xbf16>, vector<16x32xf32> -> vector<16x32xf32>
    %97 = arith.addf %74, %96 : vector<16x32xf32>
    %98 = vector.extract_strided_slice %13 {offsets = [2, 0, 0], sizes = [1, 1, 32], strides = [1, 1, 1]} : vector<4x1x32xf32> to vector<1x1x32xf32>
    %99 = vector.shape_cast %98 : vector<1x1x32xf32> to vector<1x32xf32>
    %100 = vector.broadcast %99 : vector<1x32xf32> to vector<16x32xf32>
    %101 = arith.mulf %48, %100 : vector<16x32xf32>
    %102 = arith.truncf %101 : vector<16x32xf32> to vector<16x32xbf16>
    %cst_35 = arith.constant dense<0.000000e+00> : vector<16x16xf32>
    %103 = tpu.matmul %50, %102, %cst_35 {dimension_numbers = #tpu.dot_dimension_numbers<[1], [1], [0], [0], [0, 0, 1, 0], [], []>} : vector<16x32xbf16>, vector<16x32xbf16>, vector<16x16xf32> -> vector<16x16xf32>
    %104 = arith.addf %103, %12 : vector<16x16xf32>
    %cst_36 = arith.constant dense<0xFF800000> : vector<16xf32>
    %105 = vector.multi_reduction <maximumf>, %104, %cst_36 [1] : vector<16x16xf32> to vector<16xf32>
    %106 = vector.shape_cast %105 : vector<16xf32> to vector<16x1xf32>
    %107 = vector.broadcast %106 : vector<16x1xf32> to vector<16x16xf32>
    %108 = arith.subf %104, %107 : vector<16x16xf32>
    %109 = math.exp %108 : vector<16x16xf32>
    %cst_37 = arith.constant dense<0.000000e+00> : vector<16xf32>
    %110 = vector.multi_reduction <add>, %109, %cst_37 [1] : vector<16x16xf32> to vector<16xf32>
    %111 = vector.shape_cast %110 : vector<16xf32> to vector<16x1xf32>
    %112 = tpu.reciprocal %111 {approx = true} : vector<16x1xf32> -> vector<16x1xf32>
    %113 = vector.broadcast %112 : vector<16x1xf32> to vector<16x16xf32>
    %114 = arith.mulf %109, %113 : vector<16x16xf32>
    %115 = arith.truncf %114 : vector<16x16xf32> to vector<16x16xbf16>
    %116 = vector.broadcast %99 : vector<1x32xf32> to vector<16x32xf32>
    %117 = arith.mulf %49, %116 : vector<16x32xf32>
    %118 = arith.truncf %117 : vector<16x32xf32> to vector<16x32xbf16>
    %cst_38 = arith.constant dense<0.000000e+00> : vector<16x32xf32>
    %119 = tpu.matmul %115, %118, %cst_38 {dimension_numbers = #tpu.dot_dimension_numbers<[1], [0], [0], [1], [0, 0, 1, 1], [], []>} : vector<16x16xbf16>, vector<16x32xbf16>, vector<16x32xf32> -> vector<16x32xf32>
    %120 = arith.addf %97, %119 : vector<16x32xf32>
    %121 = vector.extract_strided_slice %13 {offsets = [3, 0, 0], sizes = [1, 1, 32], strides = [1, 1, 1]} : vector<4x1x32xf32> to vector<1x1x32xf32>
    %122 = vector.shape_cast %121 : vector<1x1x32xf32> to vector<1x32xf32>
    %123 = vector.broadcast %122 : vector<1x32xf32> to vector<16x32xf32>
    %124 = arith.mulf %48, %123 : vector<16x32xf32>
    %125 = arith.truncf %124 : vector<16x32xf32> to vector<16x32xbf16>
    %cst_39 = arith.constant dense<0.000000e+00> : vector<16x16xf32>
    %126 = tpu.matmul %50, %125, %cst_39 {dimension_numbers = #tpu.dot_dimension_numbers<[1], [1], [0], [0], [0, 0, 1, 0], [], []>} : vector<16x32xbf16>, vector<16x32xbf16>, vector<16x16xf32> -> vector<16x16xf32>
    %127 = arith.addf %126, %12 : vector<16x16xf32>
    %cst_40 = arith.constant dense<0xFF800000> : vector<16xf32>
    %128 = vector.multi_reduction <maximumf>, %127, %cst_40 [1] : vector<16x16xf32> to vector<16xf32>
    %129 = vector.shape_cast %128 : vector<16xf32> to vector<16x1xf32>
    %130 = vector.broadcast %129 : vector<16x1xf32> to vector<16x16xf32>
    %131 = arith.subf %127, %130 : vector<16x16xf32>
    %132 = math.exp %131 : vector<16x16xf32>
    %cst_41 = arith.constant dense<0.000000e+00> : vector<16xf32>
    %133 = vector.multi_reduction <add>, %132, %cst_41 [1] : vector<16x16xf32> to vector<16xf32>
    %134 = vector.shape_cast %133 : vector<16xf32> to vector<16x1xf32>
    %135 = tpu.reciprocal %134 {approx = true} : vector<16x1xf32> -> vector<16x1xf32>
    %136 = vector.broadcast %135 : vector<16x1xf32> to vector<16x16xf32>
    %137 = arith.mulf %132, %136 : vector<16x16xf32>
    %138 = arith.truncf %137 : vector<16x16xf32> to vector<16x16xbf16>
    %139 = vector.broadcast %122 : vector<1x32xf32> to vector<16x32xf32>
    %140 = arith.mulf %49, %139 : vector<16x32xf32>
    %141 = arith.truncf %140 : vector<16x32xf32> to vector<16x32xbf16>
    %cst_42 = arith.constant dense<0.000000e+00> : vector<16x32xf32>
    %142 = tpu.matmul %138, %141, %cst_42 {dimension_numbers = #tpu.dot_dimension_numbers<[1], [0], [0], [1], [0, 0, 1, 1], [], []>} : vector<16x16xbf16>, vector<16x32xbf16>, vector<16x32xf32> -> vector<16x32xf32>
    %143 = arith.addf %120, %142 : vector<16x32xf32>
    %144 = arith.truncf %143 : vector<16x32xf32> to vector<16x32xbf16>
    %145 = arith.index_cast %c0_i32 : i32 to index
    %c0_43 = arith.constant 0 : index
    %c0_44 = arith.constant 0 : index
    %146 = vector.load %arg9[%145, %c0_43, %c0_44] : memref<2x32x32xbf16, #tpu.memory_space<vmem>>, vector<1x32x32xbf16>
    %147 = vector.shape_cast %146 : vector<1x32x32xbf16> to vector<32x32xbf16>
    %cst_45 = arith.constant dense<0.000000e+00> : vector<16x32xf32>
    %148 = tpu.matmul %144, %147, %cst_45 {dimension_numbers = #tpu.dot_dimension_numbers<[1], [0], [0], [1], [0, 0, 1, 1], [], []>} : vector<16x32xbf16>, vector<32x32xbf16>, vector<16x32xf32> -> vector<16x32xf32>
    %149 = arith.index_cast %c0_i32 : i32 to index
    %c0_46 = arith.constant 0 : index
    %c0_47 = arith.constant 0 : index
    %150 = vector.load %arg10[%149, %c0_46, %c0_47] : memref<2x1x32xf32, #tpu.memory_space<vmem>>, vector<1x1x32xf32>
    %151 = vector.shape_cast %150 : vector<1x1x32xf32> to vector<1x32xf32>
    %152 = vector.broadcast %151 : vector<1x32xf32> to vector<16x32xf32>
    %153 = arith.addf %148, %152 : vector<16x32xf32>
    %154 = arith.addf %153, %36 : vector<16x32xf32>
    %155 = arith.index_cast %c0_i32 : i32 to index
    %c0_48 = arith.constant 0 : index
    %c0_49 = arith.constant 0 : index
    %156 = vector.load %arg11[%155, %c0_48, %c0_49] : memref<2x1x32xf32, #tpu.memory_space<vmem>>, vector<1x1x32xf32>
    %157 = vector.shape_cast %156 : vector<1x1x32xf32> to vector<1x32xf32>
    %158 = arith.index_cast %c0_i32 : i32 to index
    %c0_50 = arith.constant 0 : index
    %c0_51 = arith.constant 0 : index
    %159 = vector.load %arg12[%158, %c0_50, %c0_51] : memref<2x1x32xf32, #tpu.memory_space<vmem>>, vector<1x1x32xf32>
    %160 = vector.shape_cast %159 : vector<1x1x32xf32> to vector<1x32xf32>
    %cst_52 = arith.constant dense<0.000000e+00> : vector<16xf32>
    %161 = vector.multi_reduction <add>, %154, %cst_52 [1] : vector<16x32xf32> to vector<16xf32>
    %162 = vector.shape_cast %161 : vector<16xf32> to vector<16x1xf32>
    %cst_53 = arith.constant 3.200000e+01 : f32
    %163 = vector.broadcast %cst_53 : f32 to vector<16x1xf32>
    %164 = arith.divf %162, %163 : vector<16x1xf32>
    %165 = vector.broadcast %164 : vector<16x1xf32> to vector<16x32xf32>
    %166 = arith.subf %154, %165 : vector<16x32xf32>
    %167 = arith.mulf %166, %166 : vector<16x32xf32>
    %cst_54 = arith.constant dense<0.000000e+00> : vector<16xf32>
    %168 = vector.multi_reduction <add>, %167, %cst_54 [1] : vector<16x32xf32> to vector<16xf32>
    %169 = vector.shape_cast %168 : vector<16xf32> to vector<16x1xf32>
    %cst_55 = arith.constant 3.200000e+01 : f32
    %170 = vector.broadcast %cst_55 : f32 to vector<16x1xf32>
    %171 = arith.divf %169, %170 : vector<16x1xf32>
    %cst_56 = arith.constant 9.99999996E-13 : f32
    %172 = vector.broadcast %cst_56 : f32 to vector<16x1xf32>
    %173 = arith.addf %171, %172 : vector<16x1xf32>
    %174 = math.rsqrt %173 : vector<16x1xf32>
    %175 = vector.broadcast %174 : vector<16x1xf32> to vector<16x32xf32>
    %176 = arith.mulf %166, %175 : vector<16x32xf32>
    %177 = vector.broadcast %157 : vector<1x32xf32> to vector<16x32xf32>
    %178 = arith.mulf %176, %177 : vector<16x32xf32>
    %179 = vector.broadcast %160 : vector<1x32xf32> to vector<16x32xf32>
    %180 = arith.addf %178, %179 : vector<16x32xf32>
    %181 = arith.truncf %180 : vector<16x32xf32> to vector<16x32xbf16>
    %182 = arith.index_cast %c0_i32 : i32 to index
    %c0_57 = arith.constant 0 : index
    %c0_58 = arith.constant 0 : index
    %183 = vector.load %arg13[%182, %c0_57, %c0_58] : memref<2x32x64xbf16, #tpu.memory_space<vmem>>, vector<1x32x64xbf16>
    %184 = vector.shape_cast %183 : vector<1x32x64xbf16> to vector<32x64xbf16>
    %cst_59 = arith.constant dense<0.000000e+00> : vector<16x64xf32>
    %185 = tpu.matmul %181, %184, %cst_59 {dimension_numbers = #tpu.dot_dimension_numbers<[1], [0], [0], [1], [0, 0, 1, 1], [], []>} : vector<16x32xbf16>, vector<32x64xbf16>, vector<16x64xf32> -> vector<16x64xf32>
    %186 = arith.index_cast %c0_i32 : i32 to index
    %c0_60 = arith.constant 0 : index
    %c0_61 = arith.constant 0 : index
    %187 = vector.load %arg14[%186, %c0_60, %c0_61] : memref<2x1x64xf32, #tpu.memory_space<vmem>>, vector<1x1x64xf32>
    %188 = vector.shape_cast %187 : vector<1x1x64xf32> to vector<1x64xf32>
    %189 = vector.broadcast %188 : vector<1x64xf32> to vector<16x64xf32>
    %190 = arith.addf %185, %189 : vector<16x64xf32>
    %cst_62 = arith.constant 5.000000e-01 : f32
    %191 = vector.broadcast %cst_62 : f32 to vector<16x64xf32>
    %192 = arith.mulf %191, %190 : vector<16x64xf32>
    %cst_63 = arith.constant 4.471500e-02 : f32
    %193 = vector.broadcast %cst_63 : f32 to vector<16x64xf32>
    %194 = arith.mulf %193, %190 : vector<16x64xf32>
    %195 = arith.mulf %194, %190 : vector<16x64xf32>
    %196 = arith.mulf %195, %190 : vector<16x64xf32>
    %197 = arith.addf %190, %196 : vector<16x64xf32>
    %cst_64 = arith.constant 0.797884583 : f32
    %198 = vector.broadcast %cst_64 : f32 to vector<16x64xf32>
    %199 = arith.mulf %198, %197 : vector<16x64xf32>
    %200 = math.tanh %199 : vector<16x64xf32>
    %cst_65 = arith.constant 1.000000e+00 : f32
    %201 = vector.broadcast %cst_65 : f32 to vector<16x64xf32>
    %202 = arith.addf %201, %200 : vector<16x64xf32>
    %203 = arith.mulf %192, %202 : vector<16x64xf32>
    %204 = arith.truncf %203 : vector<16x64xf32> to vector<16x64xbf16>
    %205 = arith.index_cast %c0_i32 : i32 to index
    %c0_66 = arith.constant 0 : index
    %c0_67 = arith.constant 0 : index
    %206 = vector.load %arg15[%205, %c0_66, %c0_67] : memref<2x64x32xbf16, #tpu.memory_space<vmem>>, vector<1x64x32xbf16>
    %207 = vector.shape_cast %206 : vector<1x64x32xbf16> to vector<64x32xbf16>
    %cst_68 = arith.constant dense<0.000000e+00> : vector<16x32xf32>
    %208 = tpu.matmul %204, %207, %cst_68 {dimension_numbers = #tpu.dot_dimension_numbers<[1], [0], [0], [1], [0, 0, 1, 1], [], []>} : vector<16x64xbf16>, vector<64x32xbf16>, vector<16x32xf32> -> vector<16x32xf32>
    %209 = arith.index_cast %c0_i32 : i32 to index
    %c0_69 = arith.constant 0 : index
    %c0_70 = arith.constant 0 : index
    %210 = vector.load %arg16[%209, %c0_69, %c0_70] : memref<2x1x32xf32, #tpu.memory_space<vmem>>, vector<1x1x32xf32>
    %211 = vector.shape_cast %210 : vector<1x1x32xf32> to vector<1x32xf32>
    %212 = vector.broadcast %211 : vector<1x32xf32> to vector<16x32xf32>
    %213 = arith.addf %208, %212 : vector<16x32xf32>
    %214 = arith.addf %213, %180 : vector<16x32xf32>
    %215 = arith.index_cast %c0_i32 : i32 to index
    %c0_71 = arith.constant 0 : index
    %c0_72 = arith.constant 0 : index
    %216 = vector.load %arg17[%215, %c0_71, %c0_72] : memref<2x1x32xf32, #tpu.memory_space<vmem>>, vector<1x1x32xf32>
    %217 = vector.shape_cast %216 : vector<1x1x32xf32> to vector<1x32xf32>
    %218 = arith.index_cast %c0_i32 : i32 to index
    %c0_73 = arith.constant 0 : index
    %c0_74 = arith.constant 0 : index
    %219 = vector.load %arg18[%218, %c0_73, %c0_74] : memref<2x1x32xf32, #tpu.memory_space<vmem>>, vector<1x1x32xf32>
    %220 = vector.shape_cast %219 : vector<1x1x32xf32> to vector<1x32xf32>
    %cst_75 = arith.constant dense<0.000000e+00> : vector<16xf32>
    %221 = vector.multi_reduction <add>, %214, %cst_75 [1] : vector<16x32xf32> to vector<16xf32>
    %222 = vector.shape_cast %221 : vector<16xf32> to vector<16x1xf32>
    %cst_76 = arith.constant 3.200000e+01 : f32
    %223 = vector.broadcast %cst_76 : f32 to vector<16x1xf32>
    %224 = arith.divf %222, %223 : vector<16x1xf32>
    %225 = vector.broadcast %224 : vector<16x1xf32> to vector<16x32xf32>
    %226 = arith.subf %214, %225 : vector<16x32xf32>
    %227 = arith.mulf %226, %226 : vector<16x32xf32>
    %cst_77 = arith.constant dense<0.000000e+00> : vector<16xf32>
    %228 = vector.multi_reduction <add>, %227, %cst_77 [1] : vector<16x32xf32> to vector<16xf32>
    %229 = vector.shape_cast %228 : vector<16xf32> to vector<16x1xf32>
    %cst_78 = arith.constant 3.200000e+01 : f32
    %230 = vector.broadcast %cst_78 : f32 to vector<16x1xf32>
    %231 = arith.divf %229, %230 : vector<16x1xf32>
    %cst_79 = arith.constant 9.99999996E-13 : f32
    %232 = vector.broadcast %cst_79 : f32 to vector<16x1xf32>
    %233 = arith.addf %231, %232 : vector<16x1xf32>
    %234 = math.rsqrt %233 : vector<16x1xf32>
    %235 = vector.broadcast %234 : vector<16x1xf32> to vector<16x32xf32>
    %236 = arith.mulf %226, %235 : vector<16x32xf32>
    %237 = vector.broadcast %217 : vector<1x32xf32> to vector<16x32xf32>
    %238 = arith.mulf %236, %237 : vector<16x32xf32>
    %239 = vector.broadcast %220 : vector<1x32xf32> to vector<16x32xf32>
    %240 = arith.addf %238, %239 : vector<16x32xf32>
    %c1_i32 = arith.constant 1 : i32
    %241 = arith.truncf %240 : vector<16x32xf32> to vector<16x32xbf16>
    %242 = arith.index_cast %c1_i32 : i32 to index
    %c0_80 = arith.constant 0 : index
    %c0_81 = arith.constant 0 : index
    %243 = vector.load %arg7[%242, %c0_80, %c0_81] : memref<2x32x96xbf16, #tpu.memory_space<vmem>>, vector<1x32x96xbf16>
    %244 = vector.shape_cast %243 : vector<1x32x96xbf16> to vector<32x96xbf16>
    %cst_82 = arith.constant dense<0.000000e+00> : vector<16x96xf32>
    %245 = tpu.matmul %241, %244, %cst_82 {dimension_numbers = #tpu.dot_dimension_numbers<[1], [0], [0], [1], [0, 0, 1, 1], [], []>} : vector<16x32xbf16>, vector<32x96xbf16>, vector<16x96xf32> -> vector<16x96xf32>
    %246 = arith.index_cast %c1_i32 : i32 to index
    %c0_83 = arith.constant 0 : index
    %c0_84 = arith.constant 0 : index
    %247 = vector.load %arg8[%246, %c0_83, %c0_84] : memref<2x1x96xf32, #tpu.memory_space<vmem>>, vector<1x1x96xf32>
    %248 = vector.shape_cast %247 : vector<1x1x96xf32> to vector<1x96xf32>
    %249 = vector.broadcast %248 : vector<1x96xf32> to vector<16x96xf32>
    %250 = arith.addf %245, %249 : vector<16x96xf32>
    %251 = vector.extract_strided_slice %250 {offsets = [0, 0], sizes = [16, 32], strides = [1, 1]} : vector<16x96xf32> to vector<16x32xf32>
    %252 = vector.extract_strided_slice %250 {offsets = [0, 32], sizes = [16, 32], strides = [1, 1]} : vector<16x96xf32> to vector<16x32xf32>
    %253 = vector.extract_strided_slice %250 {offsets = [0, 64], sizes = [16, 32], strides = [1, 1]} : vector<16x96xf32> to vector<16x32xf32>
    %254 = arith.truncf %251 : vector<16x32xf32> to vector<16x32xbf16>
    %cst_85 = arith.constant 0.000000e+00 : f32
    %255 = vector.broadcast %cst_85 : f32 to vector<16x32xf32>
    %256 = vector.extract_strided_slice %13 {offsets = [0, 0, 0], sizes = [1, 1, 32], strides = [1, 1, 1]} : vector<4x1x32xf32> to vector<1x1x32xf32>
    %257 = vector.shape_cast %256 : vector<1x1x32xf32> to vector<1x32xf32>
    %258 = vector.broadcast %257 : vector<1x32xf32> to vector<16x32xf32>
    %259 = arith.mulf %252, %258 : vector<16x32xf32>
    %260 = arith.truncf %259 : vector<16x32xf32> to vector<16x32xbf16>
    %cst_86 = arith.constant dense<0.000000e+00> : vector<16x16xf32>
    %261 = tpu.matmul %254, %260, %cst_86 {dimension_numbers = #tpu.dot_dimension_numbers<[1], [1], [0], [0], [0, 0, 1, 0], [], []>} : vector<16x32xbf16>, vector<16x32xbf16>, vector<16x16xf32> -> vector<16x16xf32>
    %262 = arith.addf %261, %12 : vector<16x16xf32>
    %cst_87 = arith.constant dense<0xFF800000> : vector<16xf32>
    %263 = vector.multi_reduction <maximumf>, %262, %cst_87 [1] : vector<16x16xf32> to vector<16xf32>
    %264 = vector.shape_cast %263 : vector<16xf32> to vector<16x1xf32>
    %265 = vector.broadcast %264 : vector<16x1xf32> to vector<16x16xf32>
    %266 = arith.subf %262, %265 : vector<16x16xf32>
    %267 = math.exp %266 : vector<16x16xf32>
    %cst_88 = arith.constant dense<0.000000e+00> : vector<16xf32>
    %268 = vector.multi_reduction <add>, %267, %cst_88 [1] : vector<16x16xf32> to vector<16xf32>
    %269 = vector.shape_cast %268 : vector<16xf32> to vector<16x1xf32>
    %270 = tpu.reciprocal %269 {approx = true} : vector<16x1xf32> -> vector<16x1xf32>
    %271 = vector.broadcast %270 : vector<16x1xf32> to vector<16x16xf32>
    %272 = arith.mulf %267, %271 : vector<16x16xf32>
    %273 = arith.truncf %272 : vector<16x16xf32> to vector<16x16xbf16>
    %274 = vector.broadcast %257 : vector<1x32xf32> to vector<16x32xf32>
    %275 = arith.mulf %253, %274 : vector<16x32xf32>
    %276 = arith.truncf %275 : vector<16x32xf32> to vector<16x32xbf16>
    %cst_89 = arith.constant dense<0.000000e+00> : vector<16x32xf32>
    %277 = tpu.matmul %273, %276, %cst_89 {dimension_numbers = #tpu.dot_dimension_numbers<[1], [0], [0], [1], [0, 0, 1, 1], [], []>} : vector<16x16xbf16>, vector<16x32xbf16>, vector<16x32xf32> -> vector<16x32xf32>
    %278 = arith.addf %255, %277 : vector<16x32xf32>
    %279 = vector.extract_strided_slice %13 {offsets = [1, 0, 0], sizes = [1, 1, 32], strides = [1, 1, 1]} : vector<4x1x32xf32> to vector<1x1x32xf32>
    %280 = vector.shape_cast %279 : vector<1x1x32xf32> to vector<1x32xf32>
    %281 = vector.broadcast %280 : vector<1x32xf32> to vector<16x32xf32>
    %282 = arith.mulf %252, %281 : vector<16x32xf32>
    %283 = arith.truncf %282 : vector<16x32xf32> to vector<16x32xbf16>
    %cst_90 = arith.constant dense<0.000000e+00> : vector<16x16xf32>
    %284 = tpu.matmul %254, %283, %cst_90 {dimension_numbers = #tpu.dot_dimension_numbers<[1], [1], [0], [0], [0, 0, 1, 0], [], []>} : vector<16x32xbf16>, vector<16x32xbf16>, vector<16x16xf32> -> vector<16x16xf32>
    %285 = arith.addf %284, %12 : vector<16x16xf32>
    %cst_91 = arith.constant dense<0xFF800000> : vector<16xf32>
    %286 = vector.multi_reduction <maximumf>, %285, %cst_91 [1] : vector<16x16xf32> to vector<16xf32>
    %287 = vector.shape_cast %286 : vector<16xf32> to vector<16x1xf32>
    %288 = vector.broadcast %287 : vector<16x1xf32> to vector<16x16xf32>
    %289 = arith.subf %285, %288 : vector<16x16xf32>
    %290 = math.exp %289 : vector<16x16xf32>
    %cst_92 = arith.constant dense<0.000000e+00> : vector<16xf32>
    %291 = vector.multi_reduction <add>, %290, %cst_92 [1] : vector<16x16xf32> to vector<16xf32>
    %292 = vector.shape_cast %291 : vector<16xf32> to vector<16x1xf32>
    %293 = tpu.reciprocal %292 {approx = true} : vector<16x1xf32> -> vector<16x1xf32>
    %294 = vector.broadcast %293 : vector<16x1xf32> to vector<16x16xf32>
    %295 = arith.mulf %290, %294 : vector<16x16xf32>
    %296 = arith.truncf %295 : vector<16x16xf32> to vector<16x16xbf16>
    %297 = vector.broadcast %280 : vector<1x32xf32> to vector<16x32xf32>
    %298 = arith.mulf %253, %297 : vector<16x32xf32>
    %299 = arith.truncf %298 : vector<16x32xf32> to vector<16x32xbf16>
    %cst_93 = arith.constant dense<0.000000e+00> : vector<16x32xf32>
    %300 = tpu.matmul %296, %299, %cst_93 {dimension_numbers = #tpu.dot_dimension_numbers<[1], [0], [0], [1], [0, 0, 1, 1], [], []>} : vector<16x16xbf16>, vector<16x32xbf16>, vector<16x32xf32> -> vector<16x32xf32>
    %301 = arith.addf %278, %300 : vector<16x32xf32>
    %302 = vector.extract_strided_slice %13 {offsets = [2, 0, 0], sizes = [1, 1, 32], strides = [1, 1, 1]} : vector<4x1x32xf32> to vector<1x1x32xf32>
    %303 = vector.shape_cast %302 : vector<1x1x32xf32> to vector<1x32xf32>
    %304 = vector.broadcast %303 : vector<1x32xf32> to vector<16x32xf32>
    %305 = arith.mulf %252, %304 : vector<16x32xf32>
    %306 = arith.truncf %305 : vector<16x32xf32> to vector<16x32xbf16>
    %cst_94 = arith.constant dense<0.000000e+00> : vector<16x16xf32>
    %307 = tpu.matmul %254, %306, %cst_94 {dimension_numbers = #tpu.dot_dimension_numbers<[1], [1], [0], [0], [0, 0, 1, 0], [], []>} : vector<16x32xbf16>, vector<16x32xbf16>, vector<16x16xf32> -> vector<16x16xf32>
    %308 = arith.addf %307, %12 : vector<16x16xf32>
    %cst_95 = arith.constant dense<0xFF800000> : vector<16xf32>
    %309 = vector.multi_reduction <maximumf>, %308, %cst_95 [1] : vector<16x16xf32> to vector<16xf32>
    %310 = vector.shape_cast %309 : vector<16xf32> to vector<16x1xf32>
    %311 = vector.broadcast %310 : vector<16x1xf32> to vector<16x16xf32>
    %312 = arith.subf %308, %311 : vector<16x16xf32>
    %313 = math.exp %312 : vector<16x16xf32>
    %cst_96 = arith.constant dense<0.000000e+00> : vector<16xf32>
    %314 = vector.multi_reduction <add>, %313, %cst_96 [1] : vector<16x16xf32> to vector<16xf32>
    %315 = vector.shape_cast %314 : vector<16xf32> to vector<16x1xf32>
    %316 = tpu.reciprocal %315 {approx = true} : vector<16x1xf32> -> vector<16x1xf32>
    %317 = vector.broadcast %316 : vector<16x1xf32> to vector<16x16xf32>
    %318 = arith.mulf %313, %317 : vector<16x16xf32>
    %319 = arith.truncf %318 : vector<16x16xf32> to vector<16x16xbf16>
    %320 = vector.broadcast %303 : vector<1x32xf32> to vector<16x32xf32>
    %321 = arith.mulf %253, %320 : vector<16x32xf32>
    %322 = arith.truncf %321 : vector<16x32xf32> to vector<16x32xbf16>
    %cst_97 = arith.constant dense<0.000000e+00> : vector<16x32xf32>
    %323 = tpu.matmul %319, %322, %cst_97 {dimension_numbers = #tpu.dot_dimension_numbers<[1], [0], [0], [1], [0, 0, 1, 1], [], []>} : vector<16x16xbf16>, vector<16x32xbf16>, vector<16x32xf32> -> vector<16x32xf32>
    %324 = arith.addf %301, %323 : vector<16x32xf32>
    %325 = vector.extract_strided_slice %13 {offsets = [3, 0, 0], sizes = [1, 1, 32], strides = [1, 1, 1]} : vector<4x1x32xf32> to vector<1x1x32xf32>
    %326 = vector.shape_cast %325 : vector<1x1x32xf32> to vector<1x32xf32>
    %327 = vector.broadcast %326 : vector<1x32xf32> to vector<16x32xf32>
    %328 = arith.mulf %252, %327 : vector<16x32xf32>
    %329 = arith.truncf %328 : vector<16x32xf32> to vector<16x32xbf16>
    %cst_98 = arith.constant dense<0.000000e+00> : vector<16x16xf32>
    %330 = tpu.matmul %254, %329, %cst_98 {dimension_numbers = #tpu.dot_dimension_numbers<[1], [1], [0], [0], [0, 0, 1, 0], [], []>} : vector<16x32xbf16>, vector<16x32xbf16>, vector<16x16xf32> -> vector<16x16xf32>
    %331 = arith.addf %330, %12 : vector<16x16xf32>
    %cst_99 = arith.constant dense<0xFF800000> : vector<16xf32>
    %332 = vector.multi_reduction <maximumf>, %331, %cst_99 [1] : vector<16x16xf32> to vector<16xf32>
    %333 = vector.shape_cast %332 : vector<16xf32> to vector<16x1xf32>
    %334 = vector.broadcast %333 : vector<16x1xf32> to vector<16x16xf32>
    %335 = arith.subf %331, %334 : vector<16x16xf32>
    %336 = math.exp %335 : vector<16x16xf32>
    %cst_100 = arith.constant dense<0.000000e+00> : vector<16xf32>
    %337 = vector.multi_reduction <add>, %336, %cst_100 [1] : vector<16x16xf32> to vector<16xf32>
    %338 = vector.shape_cast %337 : vector<16xf32> to vector<16x1xf32>
    %339 = tpu.reciprocal %338 {approx = true} : vector<16x1xf32> -> vector<16x1xf32>
    %340 = vector.broadcast %339 : vector<16x1xf32> to vector<16x16xf32>
    %341 = arith.mulf %336, %340 : vector<16x16xf32>
    %342 = arith.truncf %341 : vector<16x16xf32> to vector<16x16xbf16>
    %343 = vector.broadcast %326 : vector<1x32xf32> to vector<16x32xf32>
    %344 = arith.mulf %253, %343 : vector<16x32xf32>
    %345 = arith.truncf %344 : vector<16x32xf32> to vector<16x32xbf16>
    %cst_101 = arith.constant dense<0.000000e+00> : vector<16x32xf32>
    %346 = tpu.matmul %342, %345, %cst_101 {dimension_numbers = #tpu.dot_dimension_numbers<[1], [0], [0], [1], [0, 0, 1, 1], [], []>} : vector<16x16xbf16>, vector<16x32xbf16>, vector<16x32xf32> -> vector<16x32xf32>
    %347 = arith.addf %324, %346 : vector<16x32xf32>
    %348 = arith.truncf %347 : vector<16x32xf32> to vector<16x32xbf16>
    %349 = arith.index_cast %c1_i32 : i32 to index
    %c0_102 = arith.constant 0 : index
    %c0_103 = arith.constant 0 : index
    %350 = vector.load %arg9[%349, %c0_102, %c0_103] : memref<2x32x32xbf16, #tpu.memory_space<vmem>>, vector<1x32x32xbf16>
    %351 = vector.shape_cast %350 : vector<1x32x32xbf16> to vector<32x32xbf16>
    %cst_104 = arith.constant dense<0.000000e+00> : vector<16x32xf32>
    %352 = tpu.matmul %348, %351, %cst_104 {dimension_numbers = #tpu.dot_dimension_numbers<[1], [0], [0], [1], [0, 0, 1, 1], [], []>} : vector<16x32xbf16>, vector<32x32xbf16>, vector<16x32xf32> -> vector<16x32xf32>
    %353 = arith.index_cast %c1_i32 : i32 to index
    %c0_105 = arith.constant 0 : index
    %c0_106 = arith.constant 0 : index
    %354 = vector.load %arg10[%353, %c0_105, %c0_106] : memref<2x1x32xf32, #tpu.memory_space<vmem>>, vector<1x1x32xf32>
    %355 = vector.shape_cast %354 : vector<1x1x32xf32> to vector<1x32xf32>
    %356 = vector.broadcast %355 : vector<1x32xf32> to vector<16x32xf32>
    %357 = arith.addf %352, %356 : vector<16x32xf32>
    %358 = arith.addf %357, %240 : vector<16x32xf32>
    %359 = arith.index_cast %c1_i32 : i32 to index
    %c0_107 = arith.constant 0 : index
    %c0_108 = arith.constant 0 : index
    %360 = vector.load %arg11[%359, %c0_107, %c0_108] : memref<2x1x32xf32, #tpu.memory_space<vmem>>, vector<1x1x32xf32>
    %361 = vector.shape_cast %360 : vector<1x1x32xf32> to vector<1x32xf32>
    %362 = arith.index_cast %c1_i32 : i32 to index
    %c0_109 = arith.constant 0 : index
    %c0_110 = arith.constant 0 : index
    %363 = vector.load %arg12[%362, %c0_109, %c0_110] : memref<2x1x32xf32, #tpu.memory_space<vmem>>, vector<1x1x32xf32>
    %364 = vector.shape_cast %363 : vector<1x1x32xf32> to vector<1x32xf32>
    %cst_111 = arith.constant dense<0.000000e+00> : vector<16xf32>
    %365 = vector.multi_reduction <add>, %358, %cst_111 [1] : vector<16x32xf32> to vector<16xf32>
    %366 = vector.shape_cast %365 : vector<16xf32> to vector<16x1xf32>
    %cst_112 = arith.constant 3.200000e+01 : f32
    %367 = vector.broadcast %cst_112 : f32 to vector<16x1xf32>
    %368 = arith.divf %366, %367 : vector<16x1xf32>
    %369 = vector.broadcast %368 : vector<16x1xf32> to vector<16x32xf32>
    %370 = arith.subf %358, %369 : vector<16x32xf32>
    %371 = arith.mulf %370, %370 : vector<16x32xf32>
    %cst_113 = arith.constant dense<0.000000e+00> : vector<16xf32>
    %372 = vector.multi_reduction <add>, %371, %cst_113 [1] : vector<16x32xf32> to vector<16xf32>
    %373 = vector.shape_cast %372 : vector<16xf32> to vector<16x1xf32>
    %cst_114 = arith.constant 3.200000e+01 : f32
    %374 = vector.broadcast %cst_114 : f32 to vector<16x1xf32>
    %375 = arith.divf %373, %374 : vector<16x1xf32>
    %cst_115 = arith.constant 9.99999996E-13 : f32
    %376 = vector.broadcast %cst_115 : f32 to vector<16x1xf32>
    %377 = arith.addf %375, %376 : vector<16x1xf32>
    %378 = math.rsqrt %377 : vector<16x1xf32>
    %379 = vector.broadcast %378 : vector<16x1xf32> to vector<16x32xf32>
    %380 = arith.mulf %370, %379 : vector<16x32xf32>
    %381 = vector.broadcast %361 : vector<1x32xf32> to vector<16x32xf32>
    %382 = arith.mulf %380, %381 : vector<16x32xf32>
    %383 = vector.broadcast %364 : vector<1x32xf32> to vector<16x32xf32>
    %384 = arith.addf %382, %383 : vector<16x32xf32>
    %385 = arith.truncf %384 : vector<16x32xf32> to vector<16x32xbf16>
    %386 = arith.index_cast %c1_i32 : i32 to index
    %c0_116 = arith.constant 0 : index
    %c0_117 = arith.constant 0 : index
    %387 = vector.load %arg13[%386, %c0_116, %c0_117] : memref<2x32x64xbf16, #tpu.memory_space<vmem>>, vector<1x32x64xbf16>
    %388 = vector.shape_cast %387 : vector<1x32x64xbf16> to vector<32x64xbf16>
    %cst_118 = arith.constant dense<0.000000e+00> : vector<16x64xf32>
    %389 = tpu.matmul %385, %388, %cst_118 {dimension_numbers = #tpu.dot_dimension_numbers<[1], [0], [0], [1], [0, 0, 1, 1], [], []>} : vector<16x32xbf16>, vector<32x64xbf16>, vector<16x64xf32> -> vector<16x64xf32>
    %390 = arith.index_cast %c1_i32 : i32 to index
    %c0_119 = arith.constant 0 : index
    %c0_120 = arith.constant 0 : index
    %391 = vector.load %arg14[%390, %c0_119, %c0_120] : memref<2x1x64xf32, #tpu.memory_space<vmem>>, vector<1x1x64xf32>
    %392 = vector.shape_cast %391 : vector<1x1x64xf32> to vector<1x64xf32>
    %393 = vector.broadcast %392 : vector<1x64xf32> to vector<16x64xf32>
    %394 = arith.addf %389, %393 : vector<16x64xf32>
    %cst_121 = arith.constant 5.000000e-01 : f32
    %395 = vector.broadcast %cst_121 : f32 to vector<16x64xf32>
    %396 = arith.mulf %395, %394 : vector<16x64xf32>
    %cst_122 = arith.constant 4.471500e-02 : f32
    %397 = vector.broadcast %cst_122 : f32 to vector<16x64xf32>
    %398 = arith.mulf %397, %394 : vector<16x64xf32>
    %399 = arith.mulf %398, %394 : vector<16x64xf32>
    %400 = arith.mulf %399, %394 : vector<16x64xf32>
    %401 = arith.addf %394, %400 : vector<16x64xf32>
    %cst_123 = arith.constant 0.797884583 : f32
    %402 = vector.broadcast %cst_123 : f32 to vector<16x64xf32>
    %403 = arith.mulf %402, %401 : vector<16x64xf32>
    %404 = math.tanh %403 : vector<16x64xf32>
    %cst_124 = arith.constant 1.000000e+00 : f32
    %405 = vector.broadcast %cst_124 : f32 to vector<16x64xf32>
    %406 = arith.addf %405, %404 : vector<16x64xf32>
    %407 = arith.mulf %396, %406 : vector<16x64xf32>
    %408 = arith.truncf %407 : vector<16x64xf32> to vector<16x64xbf16>
    %409 = arith.index_cast %c1_i32 : i32 to index
    %c0_125 = arith.constant 0 : index
    %c0_126 = arith.constant 0 : index
    %410 = vector.load %arg15[%409, %c0_125, %c0_126] : memref<2x64x32xbf16, #tpu.memory_space<vmem>>, vector<1x64x32xbf16>
    %411 = vector.shape_cast %410 : vector<1x64x32xbf16> to vector<64x32xbf16>
    %cst_127 = arith.constant dense<0.000000e+00> : vector<16x32xf32>
    %412 = tpu.matmul %408, %411, %cst_127 {dimension_numbers = #tpu.dot_dimension_numbers<[1], [0], [0], [1], [0, 0, 1, 1], [], []>} : vector<16x64xbf16>, vector<64x32xbf16>, vector<16x32xf32> -> vector<16x32xf32>
    %413 = arith.index_cast %c1_i32 : i32 to index
    %c0_128 = arith.constant 0 : index
    %c0_129 = arith.constant 0 : index
    %414 = vector.load %arg16[%413, %c0_128, %c0_129] : memref<2x1x32xf32, #tpu.memory_space<vmem>>, vector<1x1x32xf32>
    %415 = vector.shape_cast %414 : vector<1x1x32xf32> to vector<1x32xf32>
    %416 = vector.broadcast %415 : vector<1x32xf32> to vector<16x32xf32>
    %417 = arith.addf %412, %416 : vector<16x32xf32>
    %418 = arith.addf %417, %384 : vector<16x32xf32>
    %419 = arith.index_cast %c1_i32 : i32 to index
    %c0_130 = arith.constant 0 : index
    %c0_131 = arith.constant 0 : index
    %420 = vector.load %arg17[%419, %c0_130, %c0_131] : memref<2x1x32xf32, #tpu.memory_space<vmem>>, vector<1x1x32xf32>
    %421 = vector.shape_cast %420 : vector<1x1x32xf32> to vector<1x32xf32>
    %422 = arith.index_cast %c1_i32 : i32 to index
    %c0_132 = arith.constant 0 : index
    %c0_133 = arith.constant 0 : index
    %423 = vector.load %arg18[%422, %c0_132, %c0_133] : memref<2x1x32xf32, #tpu.memory_space<vmem>>, vector<1x1x32xf32>
    %424 = vector.shape_cast %423 : vector<1x1x32xf32> to vector<1x32xf32>
    %cst_134 = arith.constant dense<0.000000e+00> : vector<16xf32>
    %425 = vector.multi_reduction <add>, %418, %cst_134 [1] : vector<16x32xf32> to vector<16xf32>
    %426 = vector.shape_cast %425 : vector<16xf32> to vector<16x1xf32>
    %cst_135 = arith.constant 3.200000e+01 : f32
    %427 = vector.broadcast %cst_135 : f32 to vector<16x1xf32>
    %428 = arith.divf %426, %427 : vector<16x1xf32>
    %429 = vector.broadcast %428 : vector<16x1xf32> to vector<16x32xf32>
    %430 = arith.subf %418, %429 : vector<16x32xf32>
    %431 = arith.mulf %430, %430 : vector<16x32xf32>
    %cst_136 = arith.constant dense<0.000000e+00> : vector<16xf32>
    %432 = vector.multi_reduction <add>, %431, %cst_136 [1] : vector<16x32xf32> to vector<16xf32>
    %433 = vector.shape_cast %432 : vector<16xf32> to vector<16x1xf32>
    %cst_137 = arith.constant 3.200000e+01 : f32
    %434 = vector.broadcast %cst_137 : f32 to vector<16x1xf32>
    %435 = arith.divf %433, %434 : vector<16x1xf32>
    %cst_138 = arith.constant 9.99999996E-13 : f32
    %436 = vector.broadcast %cst_138 : f32 to vector<16x1xf32>
    %437 = arith.addf %435, %436 : vector<16x1xf32>
    %438 = math.rsqrt %437 : vector<16x1xf32>
    %439 = vector.broadcast %438 : vector<16x1xf32> to vector<16x32xf32>
    %440 = arith.mulf %430, %439 : vector<16x32xf32>
    %441 = vector.broadcast %421 : vector<1x32xf32> to vector<16x32xf32>
    %442 = arith.mulf %440, %441 : vector<16x32xf32>
    %443 = vector.broadcast %424 : vector<1x32xf32> to vector<16x32xf32>
    %444 = arith.addf %442, %443 : vector<16x32xf32>
    %c2_i32 = arith.constant 2 : i32
    %445 = arith.truncf %444 : vector<16x32xf32> to vector<16x32xbf16>
    %c0_139 = arith.constant 0 : index
    %c0_140 = arith.constant 0 : index
    %446 = vector.load %arg19[%c0_139, %c0_140] : memref<32x32xbf16, #tpu.memory_space<vmem>>, vector<32x32xbf16>
    %cst_141 = arith.constant dense<0.000000e+00> : vector<16x32xf32>
    %447 = tpu.matmul %445, %446, %cst_141 {dimension_numbers = #tpu.dot_dimension_numbers<[1], [0], [0], [1], [0, 0, 1, 1], [], []>} : vector<16x32xbf16>, vector<32x32xbf16>, vector<16x32xf32> -> vector<16x32xf32>
    %c0_142 = arith.constant 0 : index
    %c0_143 = arith.constant 0 : index
    %448 = vector.load %arg20[%c0_142, %c0_143] : memref<1x32xf32, #tpu.memory_space<vmem>>, vector<1x32xf32>
    %449 = vector.broadcast %448 : vector<1x32xf32> to vector<16x32xf32>
    %450 = arith.addf %447, %449 : vector<16x32xf32>
    %451 = math.tanh %450 : vector<16x32xf32>
    %452 = arith.truncf %451 : vector<16x32xf32> to vector<16x32xbf16>
    %c0_144 = arith.constant 0 : index
    %c0_145 = arith.constant 0 : index
    %453 = vector.load %arg21[%c0_144, %c0_145] : memref<32x128xbf16, #tpu.memory_space<vmem>>, vector<32x128xbf16>
    %cst_146 = arith.constant dense<0.000000e+00> : vector<16x128xf32>
    %454 = tpu.matmul %452, %453, %cst_146 {dimension_numbers = #tpu.dot_dimension_numbers<[1], [0], [0], [1], [0, 0, 1, 1], [], []>} : vector<16x32xbf16>, vector<32x128xbf16>, vector<16x128xf32> -> vector<16x128xf32>
    %c0_147 = arith.constant 0 : index
    %c0_148 = arith.constant 0 : index
    %455 = vector.load %arg22[%c0_147, %c0_148] : memref<1x128xf32, #tpu.memory_space<vmem>>, vector<1x128xf32>
    %456 = vector.broadcast %455 : vector<1x128xf32> to vector<16x128xf32>
    %457 = arith.addf %454, %456 : vector<16x128xf32>
    %c0_149 = arith.constant 0 : index
    %c0_150 = arith.constant 0 : index
    %458 = vector.load %arg23[%c0_149, %c0_150] : memref<16x128xf32, #tpu.memory_space<vmem>>, vector<16x128xf32>
    tpu.vector_store %arg23[%c0_149, %c0_150], %457 {strides = array<i32>} : memref<16x128xf32, #tpu.memory_space<vmem>>, vector<16x128xf32>,
    return
  }
}

</mosaic_0001>

<llo_original>
// kernel: _lambda_.1
$region0: #{_lambda_.1}
  #allocation0 [shape = 'u32[]', space=smem, size = 0x4, offset = 0x4, fixed_abs, tag = 'smem constant byte address 0x4 - core index']
  #allocation1 [shape = 'u32[144,128]{1,0:T(1,128)}', space=vmem, size = 0x12000, scoped, tag = 'internal scratch']
  %s0 = inlined_call_operand.vmem [shape: f32[16,32], index: 0, kind: input, shape index: {}]
  %s1 = inlined_call_operand.vmem [shape: f32[16,1], index: 1, kind: input, shape index: {}]
  %s2 = inlined_call_operand.vmem [shape: f32[1,16], index: 2, kind: input, shape index: {}]
  %s3 = inlined_call_operand.vmem [shape: f32[1,16], index: 3, kind: input, shape index: {}]
  %s4 = inlined_call_operand.vmem [shape: f32[4,1,32], index: 4, kind: input, shape index: {}]
  %s5 = inlined_call_operand.vmem [shape: f32[1,32], index: 5, kind: input, shape index: {}]
  %s6 = inlined_call_operand.vmem [shape: f32[1,32], index: 6, kind: input, shape index: {}]
  %s7 = inlined_call_operand.vmem [shape: bf16[2,32,96], index: 7, kind: input, shape index: {}]
  %s8 = inlined_call_operand.vmem [shape: f32[2,1,96], index: 8, kind: input, shape index: {}]
  %s9 = inlined_call_operand.vmem [shape: bf16[2,32,32], index: 9, kind: input, shape index: {}]
  %s10 = inlined_call_operand.vmem [shape: f32[2,1,32], index: 10, kind: input, shape index: {}]
  %s11 = inlined_call_operand.vmem [shape: f32[2,1,32], index: 11, kind: input, shape index: {}]
  %s12 = inlined_call_operand.vmem [shape: f32[2,1,32], index: 12, kind: input, shape index: {}]
  %s13 = inlined_call_operand.vmem [shape: bf16[2,32,64], index: 13, kind: input, shape index: {}]
  %s14 = inlined_call_operand.vmem [shape: f32[2,1,64], index: 14, kind: input, shape index: {}]
  %s15 = inlined_call_operand.vmem [shape: bf16[2,64,32], index: 15, kind: input, shape index: {}]
  %s16 = inlined_call_operand.vmem [shape: f32[2,1,32], index: 16, kind: input, shape index: {}]
  %s17 = inlined_call_operand.vmem [shape: f32[2,1,32], index: 17, kind: input, shape index: {}]
  %s18 = inlined_call_operand.vmem [shape: f32[2,1,32], index: 18, kind: input, shape index: {}]
  %s19 = inlined_call_operand.vmem [shape: bf16[32,32], index: 19, kind: input, shape index: {}]
  %s20 = inlined_call_operand.vmem [shape: f32[1,32], index: 20, kind: input, shape index: {}]
  %s21 = inlined_call_operand.vmem [shape: bf16[32,128], index: 21, kind: input, shape index: {}]
  %s22 = inlined_call_operand.vmem [shape: f32[1,128], index: 22, kind: input, shape index: {}]
  %s23 = inlined_call_operand.vmem [shape: f32[16,128], index: 23, kind: output, shape index: {}]
  %s24 = sld [smem:[#allocation0]]
  $region102: #{_lambda_.1} parent=0
    _
  %s26 = ssub.s32 1, %s24
  %s27 = scalar_select 0, %s26, %s24
  // Predicated region
  $region2: #{_lambda_.1} parent=0 // pred_check
    _
  $region3: #{_lambda_.1} parent=0 // pred_check_branch
    %29 = sbr.rel (0) target = $region5
  $region4: #{_lambda_.1} parent=0 // pred_region
    _
  $region5: #{_lambda_.1} parent=0 // pred_fallthru
    _
  // Predicated region
  $region6: #{_lambda_.1} parent=0 // pred_check
    _
  $region7: #{_lambda_.1} parent=0 // pred_check_branch
    %31 = sbr.rel (0) target = $region9
  $region8: #{_lambda_.1} parent=0 // pred_region
    _
  $region9: #{_lambda_.1} parent=0 // pred_fallthru
    _
  // Predicated region
  $region10: #{_lambda_.1} parent=0 // pred_check
    _
  $region11: #{_lambda_.1} parent=0 // pred_check_branch
    %33 = sbr.rel (0) target = $region13
  $region12: #{_lambda_.1} parent=0 // pred_region
    _
  $region13: #{_lambda_.1} parent=0 // pred_fallthru
    _
  // Predicated region
  $region14: #{_lambda_.1} parent=0 // pred_check
    _
  $region15: #{_lambda_.1} parent=0 // pred_check_branch
    %35 = sbr.rel (0) target = $region17
  $region16: #{_lambda_.1} parent=0 // pred_region
    _
  $region17: #{_lambda_.1} parent=0 // pred_fallthru
    _
  // Predicated region
  $region18: #{_lambda_.1} parent=0 // pred_check
    _
  $region19: #{_lambda_.1} parent=0 // pred_check_branch
    %37 = sbr.rel (0) target = $region21
  $region20: #{_lambda_.1} parent=0 // pred_region
    _
  $region21: #{_lambda_.1} parent=0 // pred_fallthru
    _
  // Predicated region
  $region22: #{_lambda_.1} parent=0 // pred_check
    _
  $region23: #{_lambda_.1} parent=0 // pred_check_branch
    %39 = sbr.rel (0) target = $region25
  $region24: #{_lambda_.1} parent=0 // pred_region
    _
  $region25: #{_lambda_.1} parent=0 // pred_fallthru
    _
  // Predicated region
  $region26: #{_lambda_.1} parent=0 // pred_check
    _
  $region27: #{_lambda_.1} parent=0 // pred_check_branch
    %41 = sbr.rel (0) target = $region29
  $region28: #{_lambda_.1} parent=0 // pred_region
    _
  $region29: #{_lambda_.1} parent=0 // pred_fallthru
    _
  // Predicated region
  $region30: #{_lambda_.1} parent=0 // pred_check
    _
  $region31: #{_lambda_.1} parent=0 // pred_check_branch
    %43 = sbr.rel (0) target = $region33
  $region32: #{_lambda_.1} parent=0 // pred_region
    _
  $region33: #{_lambda_.1} parent=0 // pred_fallthru
    _
  // Predicated region
  $region34: #{_lambda_.1} parent=0 // pred_check
    _
  $region35: #{_lambda_.1} parent=0 // pred_check_branch
    %45 = sbr.rel (0) target = $region37
  $region36: #{_lambda_.1} parent=0 // pred_region
    _
  $region37: #{_lambda_.1} parent=0 // pred_fallthru
    _
  // Predicated region
  $region38: #{_lambda_.1} parent=0 // pred_check
    _
  $region39: #{_lambda_.1} parent=0 // pred_check_branch
    %47 = sbr.rel (0) target = $region41
  $region40: #{_lambda_.1} parent=0 // pred_region
    _
  $region41: #{_lambda_.1} parent=0 // pred_fallthru
    _
  // Predicated region
  $region42: #{_lambda_.1} parent=0 // pred_check
    _
  $region43: #{_lambda_.1} parent=0 // pred_check_branch
    %49 = sbr.rel (0) target = $region45
  $region44: #{_lambda_.1} parent=0 // pred_region
    _
  $region45: #{_lambda_.1} parent=0 // pred_fallthru
    _
  // Predicated region
  $region46: #{_lambda_.1} parent=0 // pred_check
    _
  $region47: #{_lambda_.1} parent=0 // pred_check_branch
    %51 = sbr.rel (0) target = $region49
  $region48: #{_lambda_.1} parent=0 // pred_region
    _
  $region49: #{_lambda_.1} parent=0 // pred_fallthru
    _
  // Predicated region
  $region50: #{_lambda_.1} parent=0 // pred_check
    _
  $region51: #{_lambda_.1} parent=0 // pred_check_branch
    %53 = sbr.rel (0) target = $region53
  $region52: #{_lambda_.1} parent=0 // pred_region
    _
  $region53: #{_lambda_.1} parent=0 // pred_fallthru
    _
  // Predicated region
  $region54: #{_lambda_.1} parent=0 // pred_check
    _
  $region55: #{_lambda_.1} parent=0 // pred_check_branch
    %55 = sbr.rel (0) target = $region57
  $region56: #{_lambda_.1} parent=0 // pred_region
    _
  $region57: #{_lambda_.1} parent=0 // pred_fallthru
    _
  // Predicated region
  $region58: #{_lambda_.1} parent=0 // pred_check
    _
  $region59: #{_lambda_.1} parent=0 // pred_check_branch
    %57 = sbr.rel (0) target = $region61
  $region60: #{_lambda_.1} parent=0 // pred_region
    _
  $region61: #{_lambda_.1} parent=0 // pred_fallthru
    _
  // Predicated region
  $region62: #{_lambda_.1} parent=0 // pred_check
    _
  $region63: #{_lambda_.1} parent=0 // pred_check_branch
    %59 = sbr.rel (0) target = $region65
  $region64: #{_lambda_.1} parent=0 // pred_region
    _
  $region65: #{_lambda_.1} parent=0 // pred_fallthru
    _
  // Predicated region
  $region66: #{_lambda_.1} parent=0 // pred_check
    _
  $region67: #{_lambda_.1} parent=0 // pred_check_branch
    %61 = sbr.rel (0) target = $region69
  $region68: #{_lambda_.1} parent=0 // pred_region
    _
  $region69: #{_lambda_.1} parent=0 // pred_fallthru
    _
  // Predicated region
  $region70: #{_lambda_.1} parent=0 // pred_check
    _
  $region71: #{_lambda_.1} parent=0 // pred_check_branch
    %63 = sbr.rel (0) target = $region73
  $region72: #{_lambda_.1} parent=0 // pred_region
    _
  $region73: #{_lambda_.1} parent=0 // pred_fallthru
    _
  // Predicated region
  $region74: #{_lambda_.1} parent=0 // pred_check
    _
  $region75: #{_lambda_.1} parent=0 // pred_check_branch
    %65 = sbr.rel (0) target = $region77
  $region76: #{_lambda_.1} parent=0 // pred_region
    _
  $region77: #{_lambda_.1} parent=0 // pred_fallthru
    _
  // Predicated region
  $region78: #{_lambda_.1} parent=0 // pred_check
    _
  $region79: #{_lambda_.1} parent=0 // pred_check_branch
    %67 = sbr.rel (0) target = $region81
  $region80: #{_lambda_.1} parent=0 // pred_region
    _
  $region81: #{_lambda_.1} parent=0 // pred_fallthru
    _
  // Predicated region
  $region82: #{_lambda_.1} parent=0 // pred_check
    _
  $region83: #{_lambda_.1} parent=0 // pred_check_branch
    %69 = sbr.rel (0) target = $region85
  $region84: #{_lambda_.1} parent=0 // pred_region
    _
  $region85: #{_lambda_.1} parent=0 // pred_fallthru
    _
  // Predicated region
  $region86: #{_lambda_.1} parent=0 // pred_check
    _
  $region87: #{_lambda_.1} parent=0 // pred_check_branch
    %71 = sbr.rel (0) target = $region89
  $region88: #{_lambda_.1} parent=0 // pred_region
    _
  $region89: #{_lambda_.1} parent=0 // pred_fallthru
    _
  // Predicated region
  $region90: #{_lambda_.1} parent=0 // pred_check
    _
  $region91: #{_lambda_.1} parent=0 // pred_check_branch
    %73 = sbr.rel (0) target = $region93
  $region92: #{_lambda_.1} parent=0 // pred_region
    _
  $region93: #{_lambda_.1} parent=0 // pred_fallthru
    _
  %v75 = vld [vmem:[%s1] sm:$0xff]
  %v76 = vld [vmem:[%s1 + $0x8] sm:$0xff]
  %v77 = vld [vmem:[%s2] sm:$0x1]
  %79 = vset.pattern.permute.xlu0 0
  %80 = vperm.xlu0 %79, %v75
  %v81 = vpop.permute.xlu0 %80
  %84 = vset.pattern.permute.xlu0 0
  %85 = vperm.xlu0 %84, %v76
  %v86 = vpop.permute.xlu0 %85
  %v89 = vlaneseq
  %v90 = vshrl.u32 %v89, 7
  %v91 = vsub.s32 0, %v90
  %v92 = vrot.slane %v77, %v91
  %vm94 = vcmp.eq.f32.partialorder %v81, %v92
  %vm95 = vcmp.eq.f32.partialorder %v86, %v92
  %v96 = vld [vmem:[%s3] sm:$0x1]
  %vm97 = vcmp.gt.f32.partialorder %v96, 0.5
  %v98 = vsel %vm97, 1, 0
  %v99 = vlaneseq
  %v100 = vshrl.u32 %v99, 7
  %v101 = vsub.s32 0, %v100
  %v102 = vrot.slane %v98, %v101
  %vm103 = vcmp.eq.s32.totalorder %v102, 1
  %vm104 = vmand %vm94, %vm103
  %vm105 = vmand %vm95, %vm103
  %v106 = vsel %vm104, 0.0, -10000.0
  %v107 = vsel %vm105, 0.0, -10000.0
  %v108 = vld [vmem:[%s4] sm:$0x1]
  %v109 = vld [vmem:[%s4 + $0x1] sm:$0x1]
  %v110 = vld [vmem:[%s4 + $0x2] sm:$0x1]
  %v111 = vld [vmem:[%s4 + $0x3] sm:$0x1]
  %v112 = vld [vmem:[%s0] sm:$0xff]
  %v113 = vld [vmem:[%s0 + $0x8] sm:$0xff]
  %v114 = vld [vmem:[%s5] sm:$0x1]
  %v115 = vld [vmem:[%s6] sm:$0x1]
  %vm116 = vcmask 261120
  %v117 = vsel %vm116, %v112, 0.0
  %118 = vadd.xlane.f32.xlu0 %v117
  %v119 = vpop.xlane.xlu0 %118
  %v120 = vsel %vm116, %v113, 0.0
  %121 = vadd.xlane.f32.xlu0 %v120
  %v122 = vpop.xlane.xlu0 %121
  %v123 = vrcp.pop 32.0
  %v124 = vmul.f32 %v119, %v123
  %v125 = vmul.f32 %v122, %v123
  %v126 = vsub.f32 %v112, %v124
  %v127 = vsub.f32 %v113, %v125
  %v128 = vmul.f32 %v126, %v126
  %v129 = vmul.f32 %v127, %v127
  %v130 = vsel %vm116, %v128, 0.0
  %131 = vadd.xlane.f32.xlu0 %v130
  %v132 = vpop.xlane.xlu0 %131
  %v133 = vsel %vm116, %v129, 0.0
  %134 = vadd.xlane.f32.xlu0 %v133
  %v135 = vpop.xlane.xlu0 %134
  %v136 = vmul.f32 %v132, %v123
  %v137 = vmul.f32 %v135, %v123
  %v138 = vadd.f32 %v136, 1e-12
  %v139 = vadd.f32 %v137, 1e-12
  %v140 = vrsqrt.pop %v138
  %v141 = vrsqrt.pop %v139
  %v142 = vmul.f32 %v126, %v140
  %v143 = vmul.f32 %v127, %v141
  %v145 = vlaneseq
  %v146 = vshrl.u32 %v145, 7
  %v147 = vsub.s32 0, %v146
  %v148 = vrot.slane %v114, %v147
  %v150 = vmul.f32 %v142, %v148
  %v151 = vmul.f32 %v143, %v148
  %v153 = vlaneseq
  %v154 = vshrl.u32 %v153, 7
  %v155 = vsub.s32 0, %v154
  %v156 = vrot.slane %v115, %v155
  %v158 = vadd.f32 %v150, %v156
  %v159 = vadd.f32 %v151, %v156
  %v160 = vpack.c.bf16 %v159, %v158
  %v161 = vld [vmem:[%s7] sm:$0xf]
  %v162 = vld [vmem:[%s7 + $0x4] sm:$0xf]
  %v163 = vld [vmem:[%s7 + $0x8] sm:$0xf]
  %v164 = vld [vmem:[%s7 + $0xc] sm:$0xf]
  %v165 = vld [vmem:[%s8] sm:$0x1]
  %v167 = vlaneseq
  %v168 = vshrl.u32 %v167, 7
  %v169 = vsub.s32 0, %v168
  %v170 = vrot.slane %v165, %v169
  %v176 = vunpack.c.l.b16 %v161
  %v177 = vunpack.c.l.b16 %v162
  %v178 = vunpack.c.l.b16 %v163
  %v179 = vunpack.c.l.b16 %v164
  %v180 = vpack.c.b16 %v177, %v176
  %v181 = vpack.c.b16 %v179, %v178
  %v185 = vsel %vm116, %v160, 0
  %187 = vmatprep.subr.bf16.mxu0 0
  %188 = vmatpush1.bf16.msra.mxu0 %v180
  %189 = vmatprep.subr.bf16.mxu0 0
  %190 = vmatpush1.bf16.msra.mxu0 %v181
  %191 = vmatprep.subr.bf16.mxu0 0
  %192 = vmatpush1.bf16.msra.mxu0 0
  %193 = vmatprep.subr.bf16.mxu0 0
  %194 = vmatpush1.bf16.msra.mxu0 0
  %195 = vmatprep.subr.bf16.mxu0 0
  %196 = vmatpush1.bf16.msra.mxu0 0
  %197 = vmatprep.subr.bf16.mxu0 0
  %198 = vmatpush1.bf16.msra.mxu0 0
  %199 = vmatprep.subr.bf16.mxu0 0
  %200 = vmatpush1.bf16.msra.mxu0 0
  %201 = vmatprep.subr.bf16.mxu0 0
  %202 = vmatpush1.bf16.msra.mxu0 0
  %203 = vmatprep.subr.bf16.mxu0 0
  %204 = vmatpush1.bf16.msra.mxu0 0
  %205 = vmatprep.subr.bf16.mxu0 0
  %206 = vmatpush1.bf16.msra.mxu0 0
  %207 = vmatprep.subr.bf16.mxu0 0
  %208 = vmatpush1.bf16.msra.mxu0 0
  %209 = vmatprep.subr.bf16.mxu0 0
  %210 = vmatpush1.bf16.msra.mxu0 0
  %211 = vmatprep.subr.bf16.mxu0 0
  %212 = vmatpush1.bf16.msra.mxu0 0
  %213 = vmatprep.subr.bf16.mxu0 0
  %214 = vmatpush1.bf16.msra.mxu0 0
  %215 = vmatprep.subr.bf16.mxu0 0
  %216 = vmatpush1.bf16.msra.mxu0 0
  %217 = vmatprep.subr.bf16.mxu0 0
  %218 = vmatpush1.bf16.msra.mxu0 0
  %219 = vmatprep.mubr.bf16.mxu0 0
  %220 = vmatmul.mubr.bf16.gmra.mrb[0].mxu0 %v185
  %v221 = vpop.f32.mrb[0].mxu0
  %v222 = vadd.f32 %v170, %v221
  %v223 = vpop.f32.mrb[0].mxu0
  %v224 = vpop.f32.mrb[0].mxu0
  %v225 = vadd.f32 %v170, %v224
  %v226 = vpop.f32.mrb[0].mxu0
  %227 = vdwg.mxu0
  %v228 = vpack.c.bf16 %v225, %v222
  %v230 = vlaneseq
  %v231 = vshrl.u32 %v230, 7
  %v232 = vsub.s32 0, %v231
  %v233 = vrot.slane %v108, %v232
  %234 = vrot.lane.b32.xlu0 %v233, 32
  %v235 = vpop.permute.xlu0 %234
  %v237 = vmul.f32 %v222, %v235
  %v238 = vmul.f32 %v225, %v235
  %v239 = vpack.c.bf16 %v238, %v237
  %241 = vrot.lane.b32.xlu0 %v239, 96
  %v242 = vpop.permute.xlu0 %241
  %v244 = vsel %vm116, %v228, 0
  %v247 = vsel %vm116, %v242, 0
  %249 = vmatprep.subr.bf16.mxu0 0
  %250 = vmatpush1.bf16.xpose.msra.mxu0 %v247
  %251 = vmatprep.subr.bf16.mxu0 0
  %252 = vmatpush1.bf16.xpose.msra.mxu0 0
  %253 = vmatprep.subr.bf16.mxu0 0
  %254 = vmatpush1.bf16.xpose.msra.mxu0 0
  %255 = vmatprep.subr.bf16.mxu0 0
  %256 = vmatpush1.bf16.xpose.msra.mxu0 0
  %257 = vmatprep.subr.bf16.mxu0 0
  %258 = vmatpush1.bf16.xpose.msra.mxu0 0
  %259 = vmatprep.subr.bf16.mxu0 0
  %260 = vmatpush1.bf16.xpose.msra.mxu0 0
  %261 = vmatprep.subr.bf16.mxu0 0
  %262 = vmatpush1.bf16.xpose.msra.mxu0 0
  %263 = vmatprep.subr.bf16.mxu0 0
  %264 = vmatpush1.bf16.xpose.msra.mxu0 0
  %265 = vmatprep.subr.bf16.mxu0 0
  %266 = vmatpush1.bf16.xpose.msra.mxu0 0
  %267 = vmatprep.subr.bf16.mxu0 0
  %268 = vmatpush1.bf16.xpose.msra.mxu0 0
  %269 = vmatprep.subr.bf16.mxu0 0
  %270 = vmatpush1.bf16.xpose.msra.mxu0 0
  %271 = vmatprep.subr.bf16.mxu0 0
  %272 = vmatpush1.bf16.xpose.msra.mxu0 0
  %273 = vmatprep.subr.bf16.mxu0 0
  %274 = vmatpush1.bf16.xpose.msra.mxu0 0
  %275 = vmatprep.subr.bf16.mxu0 0
  %276 = vmatpush1.bf16.xpose.msra.mxu0 0
  %277 = vmatprep.subr.bf16.mxu0 0
  %278 = vmatpush1.bf16.xpose.msra.mxu0 0
  %279 = vmatprep.subr.bf16.mxu0 0
  %280 = vmatpush1.bf16.xpose.msra.mxu0 0
  %281 = vmatprep.mubr.bf16.mxu0 0
  %282 = vmatmul.mubr.bf16.gmra.mrb[0].mxu0 %v244
  %v283 = vpop.f32.mrb[0].mxu0
  %v284 = vadd.f32 %v106, %v283
  %v285 = vpop.f32.mrb[0].mxu0
  %v286 = vpop.f32.mrb[0].mxu0
  %v287 = vadd.f32 %v107, %v286
  %v288 = vpop.f32.mrb[0].mxu0
  %289 = vdwg.mxu0
  %vm290 = vcmask 130048
  %v291 = vsel %vm290, %v284, -inf
  %292 = vmax.xlane.f32.xlu0 %v291
  %v293 = vpop.xlane.xlu0 %292
  %v294 = vsel %vm290, %v287, -inf
  %295 = vmax.xlane.f32.xlu0 %v294
  %v296 = vpop.xlane.xlu0 %295
  %v297 = vsub.f32 %v284, %v293
  %v298 = vsub.f32 %v287, %v296
  %v299 = vmul.f32 %v297, 1.442695
  %v300 = vpow.pop %v299
  %v301 = vmul.f32 %v298, 1.442695
  %v302 = vpow.pop %v301
  %v303 = vsel %vm290, %v300, 0.0
  %304 = vadd.xlane.f32.xlu0 %v303
  %v305 = vpop.xlane.xlu0 %304
  %v306 = vsel %vm290, %v302, 0.0
  %307 = vadd.xlane.f32.xlu0 %v306
  %v308 = vpop.xlane.xlu0 %307
  %v309 = vrcp.pop %v305
  %v310 = vrcp.pop %v308
  %v311 = vmul.f32 %v300, %v309
  %v312 = vmul.f32 %v302, %v310
  %v313 = vpack.c.bf16 %v312, %v311
  %314 = vrot.lane.b32.xlu0 %v233, 64
  %v315 = vpop.permute.xlu0 %314
  %v317 = vmul.f32 %v222, %v315
  %v318 = vmul.f32 %v225, %v315
  %v319 = vpack.c.bf16 %v318, %v317
  %v321 = vlaneseq
  %v322 = vshrl.u32 %v321, 7
  %v323 = vsub.s32 0, %v322
  %v324 = vrot.slane %v109, %v323
  %325 = vrot.lane.b32.xlu0 %v324, 32
  %v326 = vpop.permute.xlu0 %325
  %v328 = vmul.f32 %v222, %v326
  %v329 = vmul.f32 %v225, %v326
  %v330 = vpack.c.bf16 %v329, %v328
  %332 = vrot.lane.b32.xlu0 %v330, 96
  %v333 = vpop.permute.xlu0 %332
  %v335 = vsel %vm116, %v333, 0
  %337 = vmatprep.subr.bf16.mxu0 0
  %338 = vmatpush1.bf16.xpose.msra.mxu0 %v335
  %339 = vmatprep.subr.bf16.mxu0 0
  %340 = vmatpush1.bf16.xpose.msra.mxu0 0
  %341 = vmatprep.subr.bf16.mxu0 0
  %342 = vmatpush1.bf16.xpose.msra.mxu0 0
  %343 = vmatprep.subr.bf16.mxu0 0
  %344 = vmatpush1.bf16.xpose.msra.mxu0 0
  %345 = vmatprep.subr.bf16.mxu0 0
  %346 = vmatpush1.bf16.xpose.msra.mxu0 0
  %347 = vmatprep.subr.bf16.mxu0 0
  %348 = vmatpush1.bf16.xpose.msra.mxu0 0
  %349 = vmatprep.subr.bf16.mxu0 0
  %350 = vmatpush1.bf16.xpose.msra.mxu0 0
  %351 = vmatprep.subr.bf16.mxu0 0
  %352 = vmatpush1.bf16.xpose.msra.mxu0 0
  %353 = vmatprep.subr.bf16.mxu0 0
  %354 = vmatpush1.bf16.xpose.msra.mxu0 0
  %355 = vmatprep.subr.bf16.mxu0 0
  %356 = vmatpush1.bf16.xpose.msra.mxu0 0
  %357 = vmatprep.subr.bf16.mxu0 0
  %358 = vmatpush1.bf16.xpose.msra.mxu0 0
  %359 = vmatprep.subr.bf16.mxu0 0
  %360 = vmatpush1.bf16.xpose.msra.mxu0 0
  %361 = vmatprep.subr.bf16.mxu0 0
  %362 = vmatpush1.bf16.xpose.msra.mxu0 0
  %363 = vmatprep.subr.bf16.mxu0 0
  %364 = vmatpush1.bf16.xpose.msra.mxu0 0
  %365 = vmatprep.subr.bf16.mxu0 0
  %366 = vmatpush1.bf16.xpose.msra.mxu0 0
  %367 = vmatprep.subr.bf16.mxu0 0
  %368 = vmatpush1.bf16.xpose.msra.mxu0 0
  %369 = vmatprep.mubr.bf16.mxu0 0
  %370 = vmatmul.mubr.bf16.gmra.mrb[0].mxu0 %v244
  %v371 = vpop.f32.mrb[0].mxu0
  %v372 = vadd.f32 %v106, %v371
  %v373 = vpop.f32.mrb[0].mxu0
  %v374 = vpop.f32.mrb[0].mxu0
  %v375 = vadd.f32 %v107, %v374
  %v376 = vpop.f32.mrb[0].mxu0
  %377 = vdwg.mxu0
  %v378 = vsel %vm290, %v372, -inf
  %379 = vmax.xlane.f32.xlu0 %v378
  %v380 = vpop.xlane.xlu0 %379
  %v381 = vsel %vm290, %v375, -inf
  %382 = vmax.xlane.f32.xlu0 %v381
  %v383 = vpop.xlane.xlu0 %382
  %v384 = vsub.f32 %v372, %v380
  %v385 = vsub.f32 %v375, %v383
  %v386 = vmul.f32 %v384, 1.442695
  %v387 = vpow.pop %v386
  %v388 = vmul.f32 %v385, 1.442695
  %v389 = vpow.pop %v388
  %v390 = vsel %vm290, %v387, 0.0
  %391 = vadd.xlane.f32.xlu0 %v390
  %v392 = vpop.xlane.xlu0 %391
  %v393 = vsel %vm290, %v389, 0.0
  %394 = vadd.xlane.f32.xlu0 %v393
  %v395 = vpop.xlane.xlu0 %394
  %v396 = vrcp.pop %v392
  %v397 = vrcp.pop %v395
  %v398 = vmul.f32 %v387, %v396
  %v399 = vmul.f32 %v389, %v397
  %v400 = vpack.c.bf16 %v399, %v398
  %401 = vrot.lane.b32.xlu0 %v324, 64
  %v402 = vpop.permute.xlu0 %401
  %v404 = vmul.f32 %v222, %v402
  %v405 = vmul.f32 %v225, %v402
  %v406 = vpack.c.bf16 %v405, %v404
  %408 = vrot.lane.b32.xlu0 %v406, 64
  %v409 = vpop.permute.xlu0 %408
  %v412 = vsel %vm290, %v400, 0
  %414 = vmatprep.subr.bf16.mxu0 0
  %415 = vmatpush1.bf16.msra.mxu0 %v409
  %416 = vmatprep.subr.bf16.mxu0 0
  %417 = vmatpush1.bf16.msra.mxu0 0
  %418 = vmatprep.subr.bf16.mxu0 0
  %419 = vmatpush1.bf16.msra.mxu0 0
  %420 = vmatprep.subr.bf16.mxu0 0
  %421 = vmatpush1.bf16.msra.mxu0 0
  %422 = vmatprep.subr.bf16.mxu0 0
  %423 = vmatpush1.bf16.msra.mxu0 0
  %424 = vmatprep.subr.bf16.mxu0 0
  %425 = vmatpush1.bf16.msra.mxu0 0
  %426 = vmatprep.subr.bf16.mxu0 0
  %427 = vmatpush1.bf16.msra.mxu0 0
  %428 = vmatprep.subr.bf16.mxu0 0
  %429 = vmatpush1.bf16.msra.mxu0 0
  %430 = vmatprep.subr.bf16.mxu0 0
  %431 = vmatpush1.bf16.msra.mxu0 0
  %432 = vmatprep.subr.bf16.mxu0 0
  %433 = vmatpush1.bf16.msra.mxu0 0
  %434 = vmatprep.subr.bf16.mxu0 0
  %435 = vmatpush1.bf16.msra.mxu0 0
  %436 = vmatprep.subr.bf16.mxu0 0
  %437 = vmatpush1.bf16.msra.mxu0 0
  %438 = vmatprep.subr.bf16.mxu0 0
  %439 = vmatpush1.bf16.msra.mxu0 0
  %440 = vmatprep.subr.bf16.mxu0 0
  %441 = vmatpush1.bf16.msra.mxu0 0
  %442 = vmatprep.subr.bf16.mxu0 0
  %443 = vmatpush1.bf16.msra.mxu0 0
  %444 = vmatprep.subr.bf16.mxu0 0
  %445 = vmatpush1.bf16.msra.mxu0 0
  %446 = vmatprep.mubr.bf16.mxu0 0
  %447 = vmatmul.mubr.bf16.gmra.mrb[0].mxu0 %v412
  %v448 = vpop.f32.mrb[0].mxu0
  %v449 = vadd.f32 0.0, %v448
  %v450 = vpop.f32.mrb[0].mxu0
  %v451 = vpop.f32.mrb[0].mxu0
  %v452 = vadd.f32 0.0, %v451
  %v453 = vpop.f32.mrb[0].mxu0
  %454 = vdwg.mxu0
  %456 = vrot.lane.b32.xlu0 %v319, 64
  %v457 = vpop.permute.xlu0 %456
  %v460 = vsel %vm290, %v313, 0
  %462 = vmatprep.subr.bf16.mxu0 0
  %463 = vmatpush1.bf16.msra.mxu0 %v457
  %464 = vmatprep.subr.bf16.mxu0 0
  %465 = vmatpush1.bf16.msra.mxu0 0
  %466 = vmatprep.subr.bf16.mxu0 0
  %467 = vmatpush1.bf16.msra.mxu0 0
  %468 = vmatprep.subr.bf16.mxu0 0
  %469 = vmatpush1.bf16.msra.mxu0 0
  %470 = vmatprep.subr.bf16.mxu0 0
  %471 = vmatpush1.bf16.msra.mxu0 0
  %472 = vmatprep.subr.bf16.mxu0 0
  %473 = vmatpush1.bf16.msra.mxu0 0
  %474 = vmatprep.subr.bf16.mxu0 0
  %475 = vmatpush1.bf16.msra.mxu0 0
  %476 = vmatprep.subr.bf16.mxu0 0
  %477 = vmatpush1.bf16.msra.mxu0 0
  %478 = vmatprep.subr.bf16.mxu0 0
  %479 = vmatpush1.bf16.msra.mxu0 0
  %480 = vmatprep.subr.bf16.mxu0 0
  %481 = vmatpush1.bf16.msra.mxu0 0
  %482 = vmatprep.subr.bf16.mxu0 0
  %483 = vmatpush1.bf16.msra.mxu0 0
  %484 = vmatprep.subr.bf16.mxu0 0
  %485 = vmatpush1.bf16.msra.mxu0 0
  %486 = vmatprep.subr.bf16.mxu0 0
  %487 = vmatpush1.bf16.msra.mxu0 0
  %488 = vmatprep.subr.bf16.mxu0 0
  %489 = vmatpush1.bf16.msra.mxu0 0
  %490 = vmatprep.subr.bf16.mxu0 0
  %491 = vmatpush1.bf16.msra.mxu0 0
  %492 = vmatprep.subr.bf16.mxu0 0
  %493 = vmatpush1.bf16.msra.mxu0 0
  %494 = vmatprep.mubr.bf16.mxu0 0
  %495 = vmatmul.mubr.bf16.gmra.mrb[0].mxu0 %v460
  %v496 = vpop.f32.mrb[0].mxu0
  %v497 = vadd.f32 %v449, %v496
  %v498 = vpop.f32.mrb[0].mxu0
  %v499 = vpop.f32.mrb[0].mxu0
  %v500 = vadd.f32 %v452, %v499
  %v501 = vpop.f32.mrb[0].mxu0
  %502 = vdwg.mxu0
  %v504 = vlaneseq
  %v505 = vshrl.u32 %v504, 7
  %v506 = vsub.s32 0, %v505
  %v507 = vrot.slane %v110, %v506
  %508 = vrot.lane.b32.xlu0 %v507, 32
  %v509 = vpop.permute.xlu0 %508
  %v511 = vmul.f32 %v222, %v509
  %v512 = vmul.f32 %v225, %v509
  %v513 = vpack.c.bf16 %v512, %v511
  %515 = vrot.lane.b32.xlu0 %v513, 96
  %v516 = vpop.permute.xlu0 %515
  %v518 = vsel %vm116, %v516, 0
  %520 = vmatprep.subr.bf16.mxu0 0
  %521 = vmatpush1.bf16.xpose.msra.mxu0 %v518
  %522 = vmatprep.subr.bf16.mxu0 0
  %523 = vmatpush1.bf16.xpose.msra.mxu0 0
  %524 = vmatprep.subr.bf16.mxu0 0
  %525 = vmatpush1.bf16.xpose.msra.mxu0 0
  %526 = vmatprep.subr.bf16.mxu0 0
  %527 = vmatpush1.bf16.xpose.msra.mxu0 0
  %528 = vmatprep.subr.bf16.mxu0 0
  %529 = vmatpush1.bf16.xpose.msra.mxu0 0
  %530 = vmatprep.subr.bf16.mxu0 0
  %531 = vmatpush1.bf16.xpose.msra.mxu0 0
  %532 = vmatprep.subr.bf16.mxu0 0
  %533 = vmatpush1.bf16.xpose.msra.mxu0 0
  %534 = vmatprep.subr.bf16.mxu0 0
  %535 = vmatpush1.bf16.xpose.msra.mxu0 0
  %536 = vmatprep.subr.bf16.mxu0 0
  %537 = vmatpush1.bf16.xpose.msra.mxu0 0
  %538 = vmatprep.subr.bf16.mxu0 0
  %539 = vmatpush1.bf16.xpose.msra.mxu0 0
  %540 = vmatprep.subr.bf16.mxu0 0
  %541 = vmatpush1.bf16.xpose.msra.mxu0 0
  %542 = vmatprep.subr.bf16.mxu0 0
  %543 = vmatpush1.bf16.xpose.msra.mxu0 0
  %544 = vmatprep.subr.bf16.mxu0 0
  %545 = vmatpush1.bf16.xpose.msra.mxu0 0
  %546 = vmatprep.subr.bf16.mxu0 0
  %547 = vmatpush1.bf16.xpose.msra.mxu0 0
  %548 = vmatprep.subr.bf16.mxu0 0
  %549 = vmatpush1.bf16.xpose.msra.mxu0 0
  %550 = vmatprep.subr.bf16.mxu0 0
  %551 = vmatpush1.bf16.xpose.msra.mxu0 0
  %552 = vmatprep.mubr.bf16.mxu0 0
  %553 = vmatmul.mubr.bf16.gmra.mrb[0].mxu0 %v244
  %v554 = vpop.f32.mrb[0].mxu0
  %v555 = vadd.f32 %v106, %v554
  %v556 = vpop.f32.mrb[0].mxu0
  %v557 = vpop.f32.mrb[0].mxu0
  %v558 = vadd.f32 %v107, %v557
  %v559 = vpop.f32.mrb[0].mxu0
  %560 = vdwg.mxu0
  %v561 = vsel %vm290, %v555, -inf
  %562 = vmax.xlane.f32.xlu0 %v561
  %v563 = vpop.xlane.xlu0 %562
  %v564 = vsel %vm290, %v558, -inf
  %565 = vmax.xlane.f32.xlu0 %v564
  %v566 = vpop.xlane.xlu0 %565
  %v567 = vsub.f32 %v555, %v563
  %v568 = vsub.f32 %v558, %v566
  %v569 = vmul.f32 %v567, 1.442695
  %v570 = vpow.pop %v569
  %v571 = vmul.f32 %v568, 1.442695
  %v572 = vpow.pop %v571
  %v573 = vsel %vm290, %v570, 0.0
  %574 = vadd.xlane.f32.xlu0 %v573
  %v575 = vpop.xlane.xlu0 %574
  %v576 = vsel %vm290, %v572, 0.0
  %577 = vadd.xlane.f32.xlu0 %v576
  %v578 = vpop.xlane.xlu0 %577
  %v579 = vrcp.pop %v575
  %v580 = vrcp.pop %v578
  %v581 = vmul.f32 %v570, %v579
  %v582 = vmul.f32 %v572, %v580
  %v583 = vpack.c.bf16 %v582, %v581
  %584 = vrot.lane.b32.xlu0 %v507, 64
  %v585 = vpop.permute.xlu0 %584
  %v587 = vmul.f32 %v222, %v585
  %v588 = vmul.f32 %v225, %v585
  %v589 = vpack.c.bf16 %v588, %v587
  %591 = vrot.lane.b32.xlu0 %v589, 64
  %v592 = vpop.permute.xlu0 %591
  %v595 = vsel %vm290, %v583, 0
  %597 = vmatprep.subr.bf16.mxu0 0
  %598 = vmatpush1.bf16.msra.mxu0 %v592
  %599 = vmatprep.subr.bf16.mxu0 0
  %600 = vmatpush1.bf16.msra.mxu0 0
  %601 = vmatprep.subr.bf16.mxu0 0
  %602 = vmatpush1.bf16.msra.mxu0 0
  %603 = vmatprep.subr.bf16.mxu0 0
  %604 = vmatpush1.bf16.msra.mxu0 0
  %605 = vmatprep.subr.bf16.mxu0 0
  %606 = vmatpush1.bf16.msra.mxu0 0
  %607 = vmatprep.subr.bf16.mxu0 0
  %608 = vmatpush1.bf16.msra.mxu0 0
  %609 = vmatprep.subr.bf16.mxu0 0
  %610 = vmatpush1.bf16.msra.mxu0 0
  %611 = vmatprep.subr.bf16.mxu0 0
  %612 = vmatpush1.bf16.msra.mxu0 0
  %613 = vmatprep.subr.bf16.mxu0 0
  %614 = vmatpush1.bf16.msra.mxu0 0
  %615 = vmatprep.subr.bf16.mxu0 0
  %616 = vmatpush1.bf16.msra.mxu0 0
  %617 = vmatprep.subr.bf16.mxu0 0
  %618 = vmatpush1.bf16.msra.mxu0 0
  %619 = vmatprep.subr.bf16.mxu0 0
  %620 = vmatpush1.bf16.msra.mxu0 0
  %621 = vmatprep.subr.bf16.mxu0 0
  %622 = vmatpush1.bf16.msra.mxu0 0
  %623 = vmatprep.subr.bf16.mxu0 0
  %624 = vmatpush1.bf16.msra.mxu0 0
  %625 = vmatprep.subr.bf16.mxu0 0
  %626 = vmatpush1.bf16.msra.mxu0 0
  %627 = vmatprep.subr.bf16.mxu0 0
  %628 = vmatpush1.bf16.msra.mxu0 0
  %629 = vmatprep.mubr.bf16.mxu0 0
  %630 = vmatmul.mubr.bf16.gmra.mrb[0].mxu0 %v595
  %v631 = vpop.f32.mrb[0].mxu0
  %v632 = vadd.f32 0.0, %v631
  %v633 = vpop.f32.mrb[0].mxu0
  %v634 = vpop.f32.mrb[0].mxu0
  %v635 = vadd.f32 0.0, %v634
  %v636 = vpop.f32.mrb[0].mxu0
  %637 = vdwg.mxu0
  %v638 = vadd.f32 %v497, %v632
  %v639 = vadd.f32 %v500, %v635
  %v641 = vlaneseq
  %v642 = vshrl.u32 %v641, 7
  %v643 = vsub.s32 0, %v642
  %v644 = vrot.slane %v111, %v643
  %645 = vrot.lane.b32.xlu0 %v644, 32
  %v646 = vpop.permute.xlu0 %645
  %v648 = vmul.f32 %v222, %v646
  %v649 = vmul.f32 %v225, %v646
  %v650 = vpack.c.bf16 %v649, %v648
  %652 = vrot.lane.b32.xlu0 %v650, 96
  %v653 = vpop.permute.xlu0 %652
  %v655 = vsel %vm116, %v653, 0
  %657 = vmatprep.subr.bf16.mxu0 0
  %658 = vmatpush1.bf16.xpose.msra.mxu0 %v655
  %659 = vmatprep.subr.bf16.mxu0 0
  %660 = vmatpush1.bf16.xpose.msra.mxu0 0
  %661 = vmatprep.subr.bf16.mxu0 0
  %662 = vmatpush1.bf16.xpose.msra.mxu0 0
  %663 = vmatprep.subr.bf16.mxu0 0
  %664 = vmatpush1.bf16.xpose.msra.mxu0 0
  %665 = vmatprep.subr.bf16.mxu0 0
  %666 = vmatpush1.bf16.xpose.msra.mxu0 0
  %667 = vmatprep.subr.bf16.mxu0 0
  %668 = vmatpush1.bf16.xpose.msra.mxu0 0
  %669 = vmatprep.subr.bf16.mxu0 0
  %670 = vmatpush1.bf16.xpose.msra.mxu0 0
  %671 = vmatprep.subr.bf16.mxu0 0
  %672 = vmatpush1.bf16.xpose.msra.mxu0 0
  %673 = vmatprep.subr.bf16.mxu0 0
  %674 = vmatpush1.bf16.xpose.msra.mxu0 0
  %675 = vmatprep.subr.bf16.mxu0 0
  %676 = vmatpush1.bf16.xpose.msra.mxu0 0
  %677 = vmatprep.subr.bf16.mxu0 0
  %678 = vmatpush1.bf16.xpose.msra.mxu0 0
  %679 = vmatprep.subr.bf16.mxu0 0
  %680 = vmatpush1.bf16.xpose.msra.mxu0 0
  %681 = vmatprep.subr.bf16.mxu0 0
  %682 = vmatpush1.bf16.xpose.msra.mxu0 0
  %683 = vmatprep.subr.bf16.mxu0 0
  %684 = vmatpush1.bf16.xpose.msra.mxu0 0
  %685 = vmatprep.subr.bf16.mxu0 0
  %686 = vmatpush1.bf16.xpose.msra.mxu0 0
  %687 = vmatprep.subr.bf16.mxu0 0
  %688 = vmatpush1.bf16.xpose.msra.mxu0 0
  %689 = vmatprep.mubr.bf16.mxu0 0
  %690 = vmatmul.mubr.bf16.gmra.mrb[0].mxu0 %v244
  %v691 = vpop.f32.mrb[0].mxu0
  %v692 = vadd.f32 %v106, %v691
  %v693 = vpop.f32.mrb[0].mxu0
  %v694 = vpop.f32.mrb[0].mxu0
  %v695 = vadd.f32 %v107, %v694
  %v696 = vpop.f32.mrb[0].mxu0
  %697 = vdwg.mxu0
  %v698 = vsel %vm290, %v692, -inf
  %699 = vmax.xlane.f32.xlu0 %v698
  %v700 = vpop.xlane.xlu0 %699
  %v701 = vsel %vm290, %v695, -inf
  %702 = vmax.xlane.f32.xlu0 %v701
  %v703 = vpop.xlane.xlu0 %702
  %v704 = vsub.f32 %v692, %v700
  %v705 = vsub.f32 %v695, %v703
  %v706 = vmul.f32 %v704, 1.442695
  %v707 = vpow.pop %v706
  %v708 = vmul.f32 %v705, 1.442695
  %v709 = vpow.pop %v708
  %v710 = vsel %vm290, %v707, 0.0
  %711 = vadd.xlane.f32.xlu0 %v710
  %v712 = vpop.xlane.xlu0 %711
  %v713 = vsel %vm290, %v709, 0.0
  %714 = vadd.xlane.f32.xlu0 %v713
  %v715 = vpop.xlane.xlu0 %714
  %v716 = vrcp.pop %v712
  %v717 = vrcp.pop %v715
  %v718 = vmul.f32 %v707, %v716
  %v719 = vmul.f32 %v709, %v717
  %v720 = vpack.c.bf16 %v719, %v718
  %721 = vrot.lane.b32.xlu0 %v644, 64
  %v722 = vpop.permute.xlu0 %721
  %v724 = vmul.f32 %v222, %v722
  %v725 = vmul.f32 %v225, %v722
  %v726 = vpack.c.bf16 %v725, %v724
  %728 = vrot.lane.b32.xlu0 %v726, 64
  %v729 = vpop.permute.xlu0 %728
  %v732 = vsel %vm290, %v720, 0
  %734 = vmatprep.subr.bf16.mxu0 0
  %735 = vmatpush1.bf16.msra.mxu0 %v729
  %736 = vmatprep.subr.bf16.mxu0 0
  %737 = vmatpush1.bf16.msra.mxu0 0
  %738 = vmatprep.subr.bf16.mxu0 0
  %739 = vmatpush1.bf16.msra.mxu0 0
  %740 = vmatprep.subr.bf16.mxu0 0
  %741 = vmatpush1.bf16.msra.mxu0 0
  %742 = vmatprep.subr.bf16.mxu0 0
  %743 = vmatpush1.bf16.msra.mxu0 0
  %744 = vmatprep.subr.bf16.mxu0 0
  %745 = vmatpush1.bf16.msra.mxu0 0
  %746 = vmatprep.subr.bf16.mxu0 0
  %747 = vmatpush1.bf16.msra.mxu0 0
  %748 = vmatprep.subr.bf16.mxu0 0
  %749 = vmatpush1.bf16.msra.mxu0 0
  %750 = vmatprep.subr.bf16.mxu0 0
  %751 = vmatpush1.bf16.msra.mxu0 0
  %752 = vmatprep.subr.bf16.mxu0 0
  %753 = vmatpush1.bf16.msra.mxu0 0
  %754 = vmatprep.subr.bf16.mxu0 0
  %755 = vmatpush1.bf16.msra.mxu0 0
  %756 = vmatprep.subr.bf16.mxu0 0
  %757 = vmatpush1.bf16.msra.mxu0 0
  %758 = vmatprep.subr.bf16.mxu0 0
  %759 = vmatpush1.bf16.msra.mxu0 0
  %760 = vmatprep.subr.bf16.mxu0 0
  %761 = vmatpush1.bf16.msra.mxu0 0
  %762 = vmatprep.subr.bf16.mxu0 0
  %763 = vmatpush1.bf16.msra.mxu0 0
  %764 = vmatprep.subr.bf16.mxu0 0
  %765 = vmatpush1.bf16.msra.mxu0 0
  %766 = vmatprep.mubr.bf16.mxu0 0
  %767 = vmatmul.mubr.bf16.gmra.mrb[0].mxu0 %v732
  %v768 = vpop.f32.mrb[0].mxu0
  %v769 = vadd.f32 0.0, %v768
  %v770 = vpop.f32.mrb[0].mxu0
  %v771 = vpop.f32.mrb[0].mxu0
  %v772 = vadd.f32 0.0, %v771
  %v773 = vpop.f32.mrb[0].mxu0
  %774 = vdwg.mxu0
  %v775 = vadd.f32 %v638, %v769
  %v776 = vadd.f32 %v639, %v772
  %v777 = vpack.c.bf16 %v776, %v775
  %v778 = vld [vmem:[%s9] sm:$0xf]
  %v779 = vld [vmem:[%s9 + $0x4] sm:$0xf]
  %v780 = vld [vmem:[%s9 + $0x8] sm:$0xf]
  %v781 = vld [vmem:[%s9 + $0xc] sm:$0xf]
  %v782 = vld [vmem:[%s10] sm:$0x1]
  %v784 = vlaneseq
  %v785 = vshrl.u32 %v784, 7
  %v786 = vsub.s32 0, %v785
  %v787 = vrot.slane %v782, %v786
  %v793 = vunpack.c.l.b16 %v778
  %v794 = vunpack.c.l.b16 %v779
  %v795 = vunpack.c.l.b16 %v780
  %v796 = vunpack.c.l.b16 %v781
  %v797 = vpack.c.b16 %v794, %v793
  %v798 = vpack.c.b16 %v796, %v795
  %v802 = vsel %vm116, %v777, 0
  %804 = vmatprep.subr.bf16.mxu0 0
  %805 = vmatpush1.bf16.msra.mxu0 %v797
  %806 = vmatprep.subr.bf16.mxu0 0
  %807 = vmatpush1.bf16.msra.mxu0 %v798
  %808 = vmatprep.subr.bf16.mxu0 0
  %809 = vmatpush1.bf16.msra.mxu0 0
  %810 = vmatprep.subr.bf16.mxu0 0
  %811 = vmatpush1.bf16.msra.mxu0 0
  %812 = vmatprep.subr.bf16.mxu0 0
  %813 = vmatpush1.bf16.msra.mxu0 0
  %814 = vmatprep.subr.bf16.mxu0 0
  %815 = vmatpush1.bf16.msra.mxu0 0
  %816 = vmatprep.subr.bf16.mxu0 0
  %817 = vmatpush1.bf16.msra.mxu0 0
  %818 = vmatprep.subr.bf16.mxu0 0
  %819 = vmatpush1.bf16.msra.mxu0 0
  %820 = vmatprep.subr.bf16.mxu0 0
  %821 = vmatpush1.bf16.msra.mxu0 0
  %822 = vmatprep.subr.bf16.mxu0 0
  %823 = vmatpush1.bf16.msra.mxu0 0
  %824 = vmatprep.subr.bf16.mxu0 0
  %825 = vmatpush1.bf16.msra.mxu0 0
  %826 = vmatprep.subr.bf16.mxu0 0
  %827 = vmatpush1.bf16.msra.mxu0 0
  %828 = vmatprep.subr.bf16.mxu0 0
  %829 = vmatpush1.bf16.msra.mxu0 0
  %830 = vmatprep.subr.bf16.mxu0 0
  %831 = vmatpush1.bf16.msra.mxu0 0
  %832 = vmatprep.subr.bf16.mxu0 0
  %833 = vmatpush1.bf16.msra.mxu0 0
  %834 = vmatprep.subr.bf16.mxu0 0
  %835 = vmatpush1.bf16.msra.mxu0 0
  %836 = vmatprep.mubr.bf16.mxu0 0
  %837 = vmatmul.mubr.bf16.gmra.mrb[0].mxu0 %v802
  %v838 = vpop.f32.mrb[0].mxu0
  %v839 = vadd.f32 %v787, %v838
  %v840 = vpop.f32.mrb[0].mxu0
  %v841 = vpop.f32.mrb[0].mxu0
  %v842 = vadd.f32 %v787, %v841
  %v843 = vpop.f32.mrb[0].mxu0
  %844 = vdwg.mxu0
  %v845 = vadd.f32 %v839, %v158
  %v846 = vadd.f32 %v842, %v159
  %v847 = vld [vmem:[%s11] sm:$0x1]
  %v848 = vld [vmem:[%s12] sm:$0x1]
  %v849 = vsel %vm116, %v845, 0.0
  %850 = vadd.xlane.f32.xlu0 %v849
  %v851 = vpop.xlane.xlu0 %850
  %v852 = vsel %vm116, %v846, 0.0
  %853 = vadd.xlane.f32.xlu0 %v852
  %v854 = vpop.xlane.xlu0 %853
  %v855 = vmul.f32 %v851, %v123
  %v856 = vmul.f32 %v854, %v123
  %v857 = vsub.f32 %v845, %v855
  %v858 = vsub.f32 %v846, %v856
  %v859 = vmul.f32 %v857, %v857
  %v860 = vmul.f32 %v858, %v858
  %v861 = vsel %vm116, %v859, 0.0
  %862 = vadd.xlane.f32.xlu0 %v861
  %v863 = vpop.xlane.xlu0 %862
  %v864 = vsel %vm116, %v860, 0.0
  %865 = vadd.xlane.f32.xlu0 %v864
  %v866 = vpop.xlane.xlu0 %865
  %v867 = vmul.f32 %v863, %v123
  %v868 = vmul.f32 %v866, %v123
  %v869 = vadd.f32 %v867, 1e-12
  %v870 = vadd.f32 %v868, 1e-12
  %v871 = vrsqrt.pop %v869
  %v872 = vrsqrt.pop %v870
  %v873 = vmul.f32 %v857, %v871
  %v874 = vmul.f32 %v858, %v872
  %v876 = vlaneseq
  %v877 = vshrl.u32 %v876, 7
  %v878 = vsub.s32 0, %v877
  %v879 = vrot.slane %v847, %v878
  %v881 = vmul.f32 %v873, %v879
  %v882 = vmul.f32 %v874, %v879
  %v884 = vlaneseq
  %v885 = vshrl.u32 %v884, 7
  %v886 = vsub.s32 0, %v885
  %v887 = vrot.slane %v848, %v886
  %v889 = vadd.f32 %v881, %v887
  %v890 = vadd.f32 %v882, %v887
  %v891 = vpack.c.bf16 %v890, %v889
  %v892 = vld [vmem:[%s13] sm:$0xf]
  %v893 = vld [vmem:[%s13 + $0x4] sm:$0xf]
  %v894 = vld [vmem:[%s13 + $0x8] sm:$0xf]
  %v895 = vld [vmem:[%s13 + $0xc] sm:$0xf]
  %v896 = vld [vmem:[%s14] sm:$0x1]
  %v898 = vlaneseq
  %v899 = vshrl.u32 %v898, 7
  %v900 = vsub.s32 0, %v899
  %v901 = vrot.slane %v896, %v900
  %v907 = vunpack.c.l.b16 %v892
  %v908 = vunpack.c.l.b16 %v893
  %v909 = vunpack.c.l.b16 %v894
  %v910 = vunpack.c.l.b16 %v895
  %v911 = vpack.c.b16 %v908, %v907
  %v912 = vpack.c.b16 %v910, %v909
  %v916 = vsel %vm116, %v891, 0
  %918 = vmatprep.subr.bf16.mxu0 0
  %919 = vmatpush1.bf16.msra.mxu0 %v911
  %920 = vmatprep.subr.bf16.mxu0 0
  %921 = vmatpush1.bf16.msra.mxu0 %v912
  %922 = vmatprep.subr.bf16.mxu0 0
  %923 = vmatpush1.bf16.msra.mxu0 0
  %924 = vmatprep.subr.bf16.mxu0 0
  %925 = vmatpush1.bf16.msra.mxu0 0
  %926 = vmatprep.subr.bf16.mxu0 0
  %927 = vmatpush1.bf16.msra.mxu0 0
  %928 = vmatprep.subr.bf16.mxu0 0
  %929 = vmatpush1.bf16.msra.mxu0 0
  %930 = vmatprep.subr.bf16.mxu0 0
  %931 = vmatpush1.bf16.msra.mxu0 0
  %932 = vmatprep.subr.bf16.mxu0 0
  %933 = vmatpush1.bf16.msra.mxu0 0
  %934 = vmatprep.subr.bf16.mxu0 0
  %935 = vmatpush1.bf16.msra.mxu0 0
  %936 = vmatprep.subr.bf16.mxu0 0
  %937 = vmatpush1.bf16.msra.mxu0 0
  %938 = vmatprep.subr.bf16.mxu0 0
  %939 = vmatpush1.bf16.msra.mxu0 0
  %940 = vmatprep.subr.bf16.mxu0 0
  %941 = vmatpush1.bf16.msra.mxu0 0
  %942 = vmatprep.subr.bf16.mxu0 0
  %943 = vmatpush1.bf16.msra.mxu0 0
  %944 = vmatprep.subr.bf16.mxu0 0
  %945 = vmatpush1.bf16.msra.mxu0 0
  %946 = vmatprep.subr.bf16.mxu0 0
  %947 = vmatpush1.bf16.msra.mxu0 0
  %948 = vmatprep.subr.bf16.mxu0 0
  %949 = vmatpush1.bf16.msra.mxu0 0
  %950 = vmatprep.mubr.bf16.mxu0 0
  %951 = vmatmul.mubr.bf16.gmra.mrb[0].mxu0 %v916
  %v952 = vpop.f32.mrb[0].mxu0
  %v953 = vadd.f32 %v901, %v952
  %v954 = vpop.f32.mrb[0].mxu0
  %v955 = vpop.f32.mrb[0].mxu0
  %v956 = vadd.f32 %v901, %v955
  %v957 = vpop.f32.mrb[0].mxu0
  %958 = vdwg.mxu0
  %v959 = vmul.f32 %v953, 0.5
  %v960 = vmul.f32 %v956, 0.5
  %v961 = vmul.f32 %v953, 0.044715
  %v962 = vmul.f32 %v956, 0.044715
  %v963 = vmul.f32 %v961, %v953
  %v964 = vmul.f32 %v962, %v956
  %v965 = vmul.f32 %v963, %v953
  %v966 = vmul.f32 %v964, %v956
  %v967 = vadd.f32 %v953, %v965
  %v968 = vadd.f32 %v956, %v966
  %v969 = vmul.f32 %v967, 0.7978846
  %v970 = vmul.f32 %v968, 0.7978846
  %v971 = vtanh.pop %v969
  %v972 = vtanh.pop %v970
  %v973 = vadd.f32 %v971, 1.0
  %v974 = vadd.f32 %v972, 1.0
  %v975 = vmul.f32 %v959, %v973
  %v976 = vmul.f32 %v960, %v974
  %v977 = vpack.c.bf16 %v976, %v975
  %v978 = vld [vmem:[%s15] sm:$0xf]
  %v979 = vld [vmem:[%s15 + $0x4] sm:$0xf]
  %v980 = vld [vmem:[%s15 + $0x8] sm:$0xf]
  %v981 = vld [vmem:[%s15 + $0xc] sm:$0xf]
  %v982 = vld [vmem:[%s15 + $0x10] sm:$0xf]
  %v983 = vld [vmem:[%s15 + $0x14] sm:$0xf]
  %v984 = vld [vmem:[%s15 + $0x18] sm:$0xf]
  %v985 = vld [vmem:[%s15 + $0x1c] sm:$0xf]
  %v986 = vld [vmem:[%s16] sm:$0x1]
  %v988 = vlaneseq
  %v989 = vshrl.u32 %v988, 7
  %v990 = vsub.s32 0, %v989
  %v991 = vrot.slane %v986, %v990
  %v1001 = vunpack.c.l.b16 %v978
  %v1002 = vunpack.c.l.b16 %v979
  %v1003 = vunpack.c.l.b16 %v980
  %v1004 = vunpack.c.l.b16 %v981
  %v1005 = vunpack.c.l.b16 %v982
  %v1006 = vunpack.c.l.b16 %v983
  %v1007 = vunpack.c.l.b16 %v984
  %v1008 = vunpack.c.l.b16 %v985
  %v1009 = vpack.c.b16 %v1002, %v1001
  %v1010 = vpack.c.b16 %v1004, %v1003
  %v1011 = vpack.c.b16 %v1006, %v1005
  %v1012 = vpack.c.b16 %v1008, %v1007
  %vm1017 = vcmask 523264
  %v1019 = vsel %vm1017, %v977, 0
  %1021 = vmatprep.subr.bf16.mxu0 0
  %1022 = vmatpush1.bf16.msra.mxu0 %v1009
  %1023 = vmatprep.subr.bf16.mxu0 0
  %1024 = vmatpush1.bf16.msra.mxu0 %v1010
  %1025 = vmatprep.subr.bf16.mxu0 0
  %1026 = vmatpush1.bf16.msra.mxu0 %v1011
  %1027 = vmatprep.subr.bf16.mxu0 0
  %1028 = vmatpush1.bf16.msra.mxu0 %v1012
  %1029 = vmatprep.subr.bf16.mxu0 0
  %1030 = vmatpush1.bf16.msra.mxu0 0
  %1031 = vmatprep.subr.bf16.mxu0 0
  %1032 = vmatpush1.bf16.msra.mxu0 0
  %1033 = vmatprep.subr.bf16.mxu0 0
  %1034 = vmatpush1.bf16.msra.mxu0 0
  %1035 = vmatprep.subr.bf16.mxu0 0
  %1036 = vmatpush1.bf16.msra.mxu0 0
  %1037 = vmatprep.subr.bf16.mxu0 0
  %1038 = vmatpush1.bf16.msra.mxu0 0
  %1039 = vmatprep.subr.bf16.mxu0 0
  %1040 = vmatpush1.bf16.msra.mxu0 0
  %1041 = vmatprep.subr.bf16.mxu0 0
  %1042 = vmatpush1.bf16.msra.mxu0 0
  %1043 = vmatprep.subr.bf16.mxu0 0
  %1044 = vmatpush1.bf16.msra.mxu0 0
  %1045 = vmatprep.subr.bf16.mxu0 0
  %1046 = vmatpush1.bf16.msra.mxu0 0
  %1047 = vmatprep.subr.bf16.mxu0 0
  %1048 = vmatpush1.bf16.msra.mxu0 0
  %1049 = vmatprep.subr.bf16.mxu0 0
  %1050 = vmatpush1.bf16.msra.mxu0 0
  %1051 = vmatprep.subr.bf16.mxu0 0
  %1052 = vmatpush1.bf16.msra.mxu0 0
  %1053 = vmatprep.mubr.bf16.mxu0 0
  %1054 = vmatmul.mubr.bf16.gmra.mrb[0].mxu0 %v1019
  %v1055 = vpop.f32.mrb[0].mxu0
  %v1056 = vadd.f32 %v991, %v1055
  %v1057 = vpop.f32.mrb[0].mxu0
  %v1058 = vpop.f32.mrb[0].mxu0
  %v1059 = vadd.f32 %v991, %v1058
  %v1060 = vpop.f32.mrb[0].mxu0
  %1061 = vdwg.mxu0
  %v1062 = vadd.f32 %v1056, %v889
  %v1063 = vadd.f32 %v1059, %v890
  %v1064 = vld [vmem:[%s17] sm:$0x1]
  %v1065 = vld [vmem:[%s18] sm:$0x1]
  %v1066 = vsel %vm116, %v1062, 0.0
  %1067 = vadd.xlane.f32.xlu0 %v1066
  %v1068 = vpop.xlane.xlu0 %1067
  %v1069 = vsel %vm116, %v1063, 0.0
  %1070 = vadd.xlane.f32.xlu0 %v1069
  %v1071 = vpop.xlane.xlu0 %1070
  %v1072 = vmul.f32 %v1068, %v123
  %v1073 = vmul.f32 %v1071, %v123
  %v1074 = vsub.f32 %v1062, %v1072
  %v1075 = vsub.f32 %v1063, %v1073
  %v1076 = vmul.f32 %v1074, %v1074
  %v1077 = vmul.f32 %v1075, %v1075
  %v1078 = vsel %vm116, %v1076, 0.0
  %1079 = vadd.xlane.f32.xlu0 %v1078
  %v1080 = vpop.xlane.xlu0 %1079
  %v1081 = vsel %vm116, %v1077, 0.0
  %1082 = vadd.xlane.f32.xlu0 %v1081
  %v1083 = vpop.xlane.xlu0 %1082
  %v1084 = vmul.f32 %v1080, %v123
  %v1085 = vmul.f32 %v1083, %v123
  %v1086 = vadd.f32 %v1084, 1e-12
  %v1087 = vadd.f32 %v1085, 1e-12
  %v1088 = vrsqrt.pop %v1086
  %v1089 = vrsqrt.pop %v1087
  %v1090 = vmul.f32 %v1074, %v1088
  %v1091 = vmul.f32 %v1075, %v1089
  %v1093 = vlaneseq
  %v1094 = vshrl.u32 %v1093, 7
  %v1095 = vsub.s32 0, %v1094
  %v1096 = vrot.slane %v1064, %v1095
  %v1098 = vmul.f32 %v1090, %v1096
  %v1099 = vmul.f32 %v1091, %v1096
  %v1101 = vlaneseq
  %v1102 = vshrl.u32 %v1101, 7
  %v1103 = vsub.s32 0, %v1102
  %v1104 = vrot.slane %v1065, %v1103
  %v1106 = vadd.f32 %v1098, %v1104
  %v1107 = vadd.f32 %v1099, %v1104
  %v1108 = vpack.c.bf16 %v1107, %v1106
  %s1109 = scalar_lea.vmem %s7, 16
  %v1110 = vld [vmem:[%s1109] sm:$0xf]
  %v1111 = vld [vmem:[%s1109 + $0x4] sm:$0xf]
  %v1112 = vld [vmem:[%s1109 + $0x8] sm:$0xf]
  %v1113 = vld [vmem:[%s1109 + $0xc] sm:$0xf]
  %s1114 = scalar_lea.vmem %s8, 1
  %v1115 = vld [vmem:[%s1114] sm:$0x1]
  %v1117 = vlaneseq
  %v1118 = vshrl.u32 %v1117, 7
  %v1119 = vsub.s32 0, %v1118
  %v1120 = vrot.slane %v1115, %v1119
  %v1126 = vunpack.c.l.b16 %v1110
  %v1127 = vunpack.c.l.b16 %v1111
  %v1128 = vunpack.c.l.b16 %v1112
  %v1129 = vunpack.c.l.b16 %v1113
  %v1130 = vpack.c.b16 %v1127, %v1126
  %v1131 = vpack.c.b16 %v1129, %v1128
  %v1135 = vsel %vm116, %v1108, 0
  %1137 = vmatprep.subr.bf16.mxu0 0
  %1138 = vmatpush1.bf16.msra.mxu0 %v1130
  %1139 = vmatprep.subr.bf16.mxu0 0
  %1140 = vmatpush1.bf16.msra.mxu0 %v1131
  %1141 = vmatprep.subr.bf16.mxu0 0
  %1142 = vmatpush1.bf16.msra.mxu0 0
  %1143 = vmatprep.subr.bf16.mxu0 0
  %1144 = vmatpush1.bf16.msra.mxu0 0
  %1145 = vmatprep.subr.bf16.mxu0 0
  %1146 = vmatpush1.bf16.msra.mxu0 0
  %1147 = vmatprep.subr.bf16.mxu0 0
  %1148 = vmatpush1.bf16.msra.mxu0 0
  %1149 = vmatprep.subr.bf16.mxu0 0
  %1150 = vmatpush1.bf16.msra.mxu0 0
  %1151 = vmatprep.subr.bf16.mxu0 0
  %1152 = vmatpush1.bf16.msra.mxu0 0
  %1153 = vmatprep.subr.bf16.mxu0 0
  %1154 = vmatpush1.bf16.msra.mxu0 0
  %1155 = vmatprep.subr.bf16.mxu0 0
  %1156 = vmatpush1.bf16.msra.mxu0 0
  %1157 = vmatprep.subr.bf16.mxu0 0
  %1158 = vmatpush1.bf16.msra.mxu0 0
  %1159 = vmatprep.subr.bf16.mxu0 0
  %1160 = vmatpush1.bf16.msra.mxu0 0
  %1161 = vmatprep.subr.bf16.mxu0 0
  %1162 = vmatpush1.bf16.msra.mxu0 0
  %1163 = vmatprep.subr.bf16.mxu0 0
  %1164 = vmatpush1.bf16.msra.mxu0 0
  %1165 = vmatprep.subr.bf16.mxu0 0
  %1166 = vmatpush1.bf16.msra.mxu0 0
  %1167 = vmatprep.subr.bf16.mxu0 0
  %1168 = vmatpush1.bf16.msra.mxu0 0
  %1169 = vmatprep.mubr.bf16.mxu0 0
  %1170 = vmatmul.mubr.bf16.gmra.mrb[0].mxu0 %v1135
  %v1171 = vpop.f32.mrb[0].mxu0
  %v1172 = vadd.f32 %v1120, %v1171
  %v1173 = vpop.f32.mrb[0].mxu0
  %v1174 = vpop.f32.mrb[0].mxu0
  %v1175 = vadd.f32 %v1120, %v1174
  %v1176 = vpop.f32.mrb[0].mxu0
  %1177 = vdwg.mxu0
  %v1178 = vpack.c.bf16 %v1175, %v1172
  %v1179 = vmul.f32 %v1172, %v235
  %v1180 = vmul.f32 %v1175, %v235
  %v1181 = vpack.c.bf16 %v1180, %v1179
  %1183 = vrot.lane.b32.xlu0 %v1181, 96
  %v1184 = vpop.permute.xlu0 %1183
  %v1186 = vsel %vm116, %v1178, 0
  %v1189 = vsel %vm116, %v1184, 0
  %1191 = vmatprep.subr.bf16.mxu0 0
  %1192 = vmatpush1.bf16.xpose.msra.mxu0 %v1189
  %1193 = vmatprep.subr.bf16.mxu0 0
  %1194 = vmatpush1.bf16.xpose.msra.mxu0 0
  %1195 = vmatprep.subr.bf16.mxu0 0
  %1196 = vmatpush1.bf16.xpose.msra.mxu0 0
  %1197 = vmatprep.subr.bf16.mxu0 0
  %1198 = vmatpush1.bf16.xpose.msra.mxu0 0
  %1199 = vmatprep.subr.bf16.mxu0 0
  %1200 = vmatpush1.bf16.xpose.msra.mxu0 0
  %1201 = vmatprep.subr.bf16.mxu0 0
  %1202 = vmatpush1.bf16.xpose.msra.mxu0 0
  %1203 = vmatprep.subr.bf16.mxu0 0
  %1204 = vmatpush1.bf16.xpose.msra.mxu0 0
  %1205 = vmatprep.subr.bf16.mxu0 0
  %1206 = vmatpush1.bf16.xpose.msra.mxu0 0
  %1207 = vmatprep.subr.bf16.mxu0 0
  %1208 = vmatpush1.bf16.xpose.msra.mxu0 0
  %1209 = vmatprep.subr.bf16.mxu0 0
  %1210 = vmatpush1.bf16.xpose.msra.mxu0 0
  %1211 = vmatprep.subr.bf16.mxu0 0
  %1212 = vmatpush1.bf16.xpose.msra.mxu0 0
  %1213 = vmatprep.subr.bf16.mxu0 0
  %1214 = vmatpush1.bf16.xpose.msra.mxu0 0
  %1215 = vmatprep.subr.bf16.mxu0 0
  %1216 = vmatpush1.bf16.xpose.msra.mxu0 0
  %1217 = vmatprep.subr.bf16.mxu0 0
  %1218 = vmatpush1.bf16.xpose.msra.mxu0 0
  %1219 = vmatprep.subr.bf16.mxu0 0
  %1220 = vmatpush1.bf16.xpose.msra.mxu0 0
  %1221 = vmatprep.subr.bf16.mxu0 0
  %1222 = vmatpush1.bf16.xpose.msra.mxu0 0
  %1223 = vmatprep.mubr.bf16.mxu0 0
  %1224 = vmatmul.mubr.bf16.gmra.mrb[0].mxu0 %v1186
  %v1225 = vpop.f32.mrb[0].mxu0
  %v1226 = vadd.f32 %v106, %v1225
  %v1227 = vpop.f32.mrb[0].mxu0
  %v1228 = vpop.f32.mrb[0].mxu0
  %v1229 = vadd.f32 %v107, %v1228
  %v1230 = vpop.f32.mrb[0].mxu0
  %1231 = vdwg.mxu0
  %v1232 = vsel %vm290, %v1226, -inf
  %1233 = vmax.xlane.f32.xlu0 %v1232
  %v1234 = vpop.xlane.xlu0 %1233
  %v1235 = vsel %vm290, %v1229, -inf
  %1236 = vmax.xlane.f32.xlu0 %v1235
  %v1237 = vpop.xlane.xlu0 %1236
  %v1238 = vsub.f32 %v1226, %v1234
  %v1239 = vsub.f32 %v1229, %v1237
  %v1240 = vmul.f32 %v1238, 1.442695
  %v1241 = vpow.pop %v1240
  %v1242 = vmul.f32 %v1239, 1.442695
  %v1243 = vpow.pop %v1242
  %v1244 = vsel %vm290, %v1241, 0.0
  %1245 = vadd.xlane.f32.xlu0 %v1244
  %v1246 = vpop.xlane.xlu0 %1245
  %v1247 = vsel %vm290, %v1243, 0.0
  %1248 = vadd.xlane.f32.xlu0 %v1247
  %v1249 = vpop.xlane.xlu0 %1248
  %v1250 = vrcp.pop %v1246
  %v1251 = vrcp.pop %v1249
  %v1252 = vmul.f32 %v1241, %v1250
  %v1253 = vmul.f32 %v1243, %v1251
  %v1254 = vpack.c.bf16 %v1253, %v1252
  %v1255 = vmul.f32 %v1172, %v315
  %v1256 = vmul.f32 %v1175, %v315
  %v1257 = vpack.c.bf16 %v1256, %v1255
  %v1258 = vmul.f32 %v1172, %v326
  %v1259 = vmul.f32 %v1175, %v326
  %v1260 = vpack.c.bf16 %v1259, %v1258
  %1262 = vrot.lane.b32.xlu0 %v1260, 96
  %v1263 = vpop.permute.xlu0 %1262
  %v1265 = vsel %vm116, %v1263, 0
  %1267 = vmatprep.subr.bf16.mxu0 0
  %1268 = vmatpush1.bf16.xpose.msra.mxu0 %v1265
  %1269 = vmatprep.subr.bf16.mxu0 0
  %1270 = vmatpush1.bf16.xpose.msra.mxu0 0
  %1271 = vmatprep.subr.bf16.mxu0 0
  %1272 = vmatpush1.bf16.xpose.msra.mxu0 0
  %1273 = vmatprep.subr.bf16.mxu0 0
  %1274 = vmatpush1.bf16.xpose.msra.mxu0 0
  %1275 = vmatprep.subr.bf16.mxu0 0
  %1276 = vmatpush1.bf16.xpose.msra.mxu0 0
  %1277 = vmatprep.subr.bf16.mxu0 0
  %1278 = vmatpush1.bf16.xpose.msra.mxu0 0
  %1279 = vmatprep.subr.bf16.mxu0 0
  %1280 = vmatpush1.bf16.xpose.msra.mxu0 0
  %1281 = vmatprep.subr.bf16.mxu0 0
  %1282 = vmatpush1.bf16.xpose.msra.mxu0 0
  %1283 = vmatprep.subr.bf16.mxu0 0
  %1284 = vmatpush1.bf16.xpose.msra.mxu0 0
  %1285 = vmatprep.subr.bf16.mxu0 0
  %1286 = vmatpush1.bf16.xpose.msra.mxu0 0
  %1287 = vmatprep.subr.bf16.mxu0 0
  %1288 = vmatpush1.bf16.xpose.msra.mxu0 0
  %1289 = vmatprep.subr.bf16.mxu0 0
  %1290 = vmatpush1.bf16.xpose.msra.mxu0 0
  %1291 = vmatprep.subr.bf16.mxu0 0
  %1292 = vmatpush1.bf16.xpose.msra.mxu0 0
  %1293 = vmatprep.subr.bf16.mxu0 0
  %1294 = vmatpush1.bf16.xpose.msra.mxu0 0
  %1295 = vmatprep.subr.bf16.mxu0 0
  %1296 = vmatpush1.bf16.xpose.msra.mxu0 0
  %1297 = vmatprep.subr.bf16.mxu0 0
  %1298 = vmatpush1.bf16.xpose.msra.mxu0 0
  %1299 = vmatprep.mubr.bf16.mxu0 0
  %1300 = vmatmul.mubr.bf16.gmra.mrb[0].mxu0 %v1186
  %v1301 = vpop.f32.mrb[0].mxu0
  %v1302 = vadd.f32 %v106, %v1301
  %v1303 = vpop.f32.mrb[0].mxu0
  %v1304 = vpop.f32.mrb[0].mxu0
  %v1305 = vadd.f32 %v107, %v1304
  %v1306 = vpop.f32.mrb[0].mxu0
  %1307 = vdwg.mxu0
  %v1308 = vsel %vm290, %v1302, -inf
  %1309 = vmax.xlane.f32.xlu0 %v1308
  %v1310 = vpop.xlane.xlu0 %1309
  %v1311 = vsel %vm290, %v1305, -inf
  %1312 = vmax.xlane.f32.xlu0 %v1311
  %v1313 = vpop.xlane.xlu0 %1312
  %v1314 = vsub.f32 %v1302, %v1310
  %v1315 = vsub.f32 %v1305, %v1313
  %v1316 = vmul.f32 %v1314, 1.442695
  %v1317 = vpow.pop %v1316
  %v1318 = vmul.f32 %v1315, 1.442695
  %v1319 = vpow.pop %v1318
  %v1320 = vsel %vm290, %v1317, 0.0
  %1321 = vadd.xlane.f32.xlu0 %v1320
  %v1322 = vpop.xlane.xlu0 %1321
  %v1323 = vsel %vm290, %v1319, 0.0
  %1324 = vadd.xlane.f32.xlu0 %v1323
  %v1325 = vpop.xlane.xlu0 %1324
  %v1326 = vrcp.pop %v1322
  %v1327 = vrcp.pop %v1325
  %v1328 = vmul.f32 %v1317, %v1326
  %v1329 = vmul.f32 %v1319, %v1327
  %v1330 = vpack.c.bf16 %v1329, %v1328
  %v1331 = vmul.f32 %v1172, %v402
  %v1332 = vmul.f32 %v1175, %v402
  %v1333 = vpack.c.bf16 %v1332, %v1331
  %1335 = vrot.lane.b32.xlu0 %v1333, 64
  %v1336 = vpop.permute.xlu0 %1335
  %v1339 = vsel %vm290, %v1330, 0
  %1341 = vmatprep.subr.bf16.mxu0 0
  %1342 = vmatpush1.bf16.msra.mxu0 %v1336
  %1343 = vmatprep.subr.bf16.mxu0 0
  %1344 = vmatpush1.bf16.msra.mxu0 0
  %1345 = vmatprep.subr.bf16.mxu0 0
  %1346 = vmatpush1.bf16.msra.mxu0 0
  %1347 = vmatprep.subr.bf16.mxu0 0
  %1348 = vmatpush1.bf16.msra.mxu0 0
  %1349 = vmatprep.subr.bf16.mxu0 0
  %1350 = vmatpush1.bf16.msra.mxu0 0
  %1351 = vmatprep.subr.bf16.mxu0 0
  %1352 = vmatpush1.bf16.msra.mxu0 0
  %1353 = vmatprep.subr.bf16.mxu0 0
  %1354 = vmatpush1.bf16.msra.mxu0 0
  %1355 = vmatprep.subr.bf16.mxu0 0
  %1356 = vmatpush1.bf16.msra.mxu0 0
  %1357 = vmatprep.subr.bf16.mxu0 0
  %1358 = vmatpush1.bf16.msra.mxu0 0
  %1359 = vmatprep.subr.bf16.mxu0 0
  %1360 = vmatpush1.bf16.msra.mxu0 0
  %1361 = vmatprep.subr.bf16.mxu0 0
  %1362 = vmatpush1.bf16.msra.mxu0 0
  %1363 = vmatprep.subr.bf16.mxu0 0
  %1364 = vmatpush1.bf16.msra.mxu0 0
  %1365 = vmatprep.subr.bf16.mxu0 0
  %1366 = vmatpush1.bf16.msra.mxu0 0
  %1367 = vmatprep.subr.bf16.mxu0 0
  %1368 = vmatpush1.bf16.msra.mxu0 0
  %1369 = vmatprep.subr.bf16.mxu0 0
  %1370 = vmatpush1.bf16.msra.mxu0 0
  %1371 = vmatprep.subr.bf16.mxu0 0
  %1372 = vmatpush1.bf16.msra.mxu0 0
  %1373 = vmatprep.mubr.bf16.mxu0 0
  %1374 = vmatmul.mubr.bf16.gmra.mrb[0].mxu0 %v1339
  %v1375 = vpop.f32.mrb[0].mxu0
  %v1376 = vadd.f32 0.0, %v1375
  %v1377 = vpop.f32.mrb[0].mxu0
  %v1378 = vpop.f32.mrb[0].mxu0
  %v1379 = vadd.f32 0.0, %v1378
  %v1380 = vpop.f32.mrb[0].mxu0
  %1381 = vdwg.mxu0
  %1383 = vrot.lane.b32.xlu0 %v1257, 64
  %v1384 = vpop.permute.xlu0 %1383
  %v1387 = vsel %vm290, %v1254, 0
  %1389 = vmatprep.subr.bf16.mxu0 0
  %1390 = vmatpush1.bf16.msra.mxu0 %v1384
  %1391 = vmatprep.subr.bf16.mxu0 0
  %1392 = vmatpush1.bf16.msra.mxu0 0
  %1393 = vmatprep.subr.bf16.mxu0 0
  %1394 = vmatpush1.bf16.msra.mxu0 0
  %1395 = vmatprep.subr.bf16.mxu0 0
  %1396 = vmatpush1.bf16.msra.mxu0 0
  %1397 = vmatprep.subr.bf16.mxu0 0
  %1398 = vmatpush1.bf16.msra.mxu0 0
  %1399 = vmatprep.subr.bf16.mxu0 0
  %1400 = vmatpush1.bf16.msra.mxu0 0
  %1401 = vmatprep.subr.bf16.mxu0 0
  %1402 = vmatpush1.bf16.msra.mxu0 0
  %1403 = vmatprep.subr.bf16.mxu0 0
  %1404 = vmatpush1.bf16.msra.mxu0 0
  %1405 = vmatprep.subr.bf16.mxu0 0
  %1406 = vmatpush1.bf16.msra.mxu0 0
  %1407 = vmatprep.subr.bf16.mxu0 0
  %1408 = vmatpush1.bf16.msra.mxu0 0
  %1409 = vmatprep.subr.bf16.mxu0 0
  %1410 = vmatpush1.bf16.msra.mxu0 0
  %1411 = vmatprep.subr.bf16.mxu0 0
  %1412 = vmatpush1.bf16.msra.mxu0 0
  %1413 = vmatprep.subr.bf16.mxu0 0
  %1414 = vmatpush1.bf16.msra.mxu0 0
  %1415 = vmatprep.subr.bf16.mxu0 0
  %1416 = vmatpush1.bf16.msra.mxu0 0
  %1417 = vmatprep.subr.bf16.mxu0 0
  %1418 = vmatpush1.bf16.msra.mxu0 0
  %1419 = vmatprep.subr.bf16.mxu0 0
  %1420 = vmatpush1.bf16.msra.mxu0 0
  %1421 = vmatprep.mubr.bf16.mxu0 0
  %1422 = vmatmul.mubr.bf16.gmra.mrb[0].mxu0 %v1387
  %v1423 = vpop.f32.mrb[0].mxu0
  %v1424 = vadd.f32 %v1376, %v1423
  %v1425 = vpop.f32.mrb[0].mxu0
  %v1426 = vpop.f32.mrb[0].mxu0
  %v1427 = vadd.f32 %v1379, %v1426
  %v1428 = vpop.f32.mrb[0].mxu0
  %1429 = vdwg.mxu0
  %v1430 = vmul.f32 %v1172, %v509
  %v1431 = vmul.f32 %v1175, %v509
  %v1432 = vpack.c.bf16 %v1431, %v1430
  %1434 = vrot.lane.b32.xlu0 %v1432, 96
  %v1435 = vpop.permute.xlu0 %1434
  %v1437 = vsel %vm116, %v1435, 0
  %1439 = vmatprep.subr.bf16.mxu0 0
  %1440 = vmatpush1.bf16.xpose.msra.mxu0 %v1437
  %1441 = vmatprep.subr.bf16.mxu0 0
  %1442 = vmatpush1.bf16.xpose.msra.mxu0 0
  %1443 = vmatprep.subr.bf16.mxu0 0
  %1444 = vmatpush1.bf16.xpose.msra.mxu0 0
  %1445 = vmatprep.subr.bf16.mxu0 0
  %1446 = vmatpush1.bf16.xpose.msra.mxu0 0
  %1447 = vmatprep.subr.bf16.mxu0 0
  %1448 = vmatpush1.bf16.xpose.msra.mxu0 0
  %1449 = vmatprep.subr.bf16.mxu0 0
  %1450 = vmatpush1.bf16.xpose.msra.mxu0 0
  %1451 = vmatprep.subr.bf16.mxu0 0
  %1452 = vmatpush1.bf16.xpose.msra.mxu0 0
  %1453 = vmatprep.subr.bf16.mxu0 0
  %1454 = vmatpush1.bf16.xpose.msra.mxu0 0
  %1455 = vmatprep.subr.bf16.mxu0 0
  %1456 = vmatpush1.bf16.xpose.msra.mxu0 0
  %1457 = vmatprep.subr.bf16.mxu0 0
  %1458 = vmatpush1.bf16.xpose.msra.mxu0 0
  %1459 = vmatprep.subr.bf16.mxu0 0
  %1460 = vmatpush1.bf16.xpose.msra.mxu0 0
  %1461 = vmatprep.subr.bf16.mxu0 0
  %1462 = vmatpush1.bf16.xpose.msra.mxu0 0
  %1463 = vmatprep.subr.bf16.mxu0 0
  %1464 = vmatpush1.bf16.xpose.msra.mxu0 0
  %1465 = vmatprep.subr.bf16.mxu0 0
  %1466 = vmatpush1.bf16.xpose.msra.mxu0 0
  %1467 = vmatprep.subr.bf16.mxu0 0
  %1468 = vmatpush1.bf16.xpose.msra.mxu0 0
  %1469 = vmatprep.subr.bf16.mxu0 0
  %1470 = vmatpush1.bf16.xpose.msra.mxu0 0
  %1471 = vmatprep.mubr.bf16.mxu0 0
  %1472 = vmatmul.mubr.bf16.gmra.mrb[0].mxu0 %v1186
  %v1473 = vpop.f32.mrb[0].mxu0
  %v1474 = vadd.f32 %v106, %v1473
  %v1475 = vpop.f32.mrb[0].mxu0
  %v1476 = vpop.f32.mrb[0].mxu0
  %v1477 = vadd.f32 %v107, %v1476
  %v1478 = vpop.f32.mrb[0].mxu0
  %1479 = vdwg.mxu0
  %v1480 = vsel %vm290, %v1474, -inf
  %1481 = vmax.xlane.f32.xlu0 %v1480
  %v1482 = vpop.xlane.xlu0 %1481
  %v1483 = vsel %vm290, %v1477, -inf
  %1484 = vmax.xlane.f32.xlu0 %v1483
  %v1485 = vpop.xlane.xlu0 %1484
  %v1486 = vsub.f32 %v1474, %v1482
  %v1487 = vsub.f32 %v1477, %v1485
  %v1488 = vmul.f32 %v1486, 1.442695
  %v1489 = vpow.pop %v1488
  %v1490 = vmul.f32 %v1487, 1.442695
  %v1491 = vpow.pop %v1490
  %v1492 = vsel %vm290, %v1489, 0.0
  %1493 = vadd.xlane.f32.xlu0 %v1492
  %v1494 = vpop.xlane.xlu0 %1493
  %v1495 = vsel %vm290, %v1491, 0.0
  %1496 = vadd.xlane.f32.xlu0 %v1495
  %v1497 = vpop.xlane.xlu0 %1496
  %v1498 = vrcp.pop %v1494
  %v1499 = vrcp.pop %v1497
  %v1500 = vmul.f32 %v1489, %v1498
  %v1501 = vmul.f32 %v1491, %v1499
  %v1502 = vpack.c.bf16 %v1501, %v1500
  %v1503 = vmul.f32 %v1172, %v585
  %v1504 = vmul.f32 %v1175, %v585
  %v1505 = vpack.c.bf16 %v1504, %v1503
  %1507 = vrot.lane.b32.xlu0 %v1505, 64
  %v1508 = vpop.permute.xlu0 %1507
  %v1511 = vsel %vm290, %v1502, 0
  %1513 = vmatprep.subr.bf16.mxu0 0
  %1514 = vmatpush1.bf16.msra.mxu0 %v1508
  %1515 = vmatprep.subr.bf16.mxu0 0
  %1516 = vmatpush1.bf16.msra.mxu0 0
  %1517 = vmatprep.subr.bf16.mxu0 0
  %1518 = vmatpush1.bf16.msra.mxu0 0
  %1519 = vmatprep.subr.bf16.mxu0 0
  %1520 = vmatpush1.bf16.msra.mxu0 0
  %1521 = vmatprep.subr.bf16.mxu0 0
  %1522 = vmatpush1.bf16.msra.mxu0 0
  %1523 = vmatprep.subr.bf16.mxu0 0
  %1524 = vmatpush1.bf16.msra.mxu0 0
  %1525 = vmatprep.subr.bf16.mxu0 0
  %1526 = vmatpush1.bf16.msra.mxu0 0
  %1527 = vmatprep.subr.bf16.mxu0 0
  %1528 = vmatpush1.bf16.msra.mxu0 0
  %1529 = vmatprep.subr.bf16.mxu0 0
  %1530 = vmatpush1.bf16.msra.mxu0 0
  %1531 = vmatprep.subr.bf16.mxu0 0
  %1532 = vmatpush1.bf16.msra.mxu0 0
  %1533 = vmatprep.subr.bf16.mxu0 0
  %1534 = vmatpush1.bf16.msra.mxu0 0
  %1535 = vmatprep.subr.bf16.mxu0 0
  %1536 = vmatpush1.bf16.msra.mxu0 0
  %1537 = vmatprep.subr.bf16.mxu0 0
  %1538 = vmatpush1.bf16.msra.mxu0 0
  %1539 = vmatprep.subr.bf16.mxu0 0
  %1540 = vmatpush1.bf16.msra.mxu0 0
  %1541 = vmatprep.subr.bf16.mxu0 0
  %1542 = vmatpush1.bf16.msra.mxu0 0
  %1543 = vmatprep.subr.bf16.mxu0 0
  %1544 = vmatpush1.bf16.msra.mxu0 0
  %1545 = vmatprep.mubr.bf16.mxu0 0
  %1546 = vmatmul.mubr.bf16.gmra.mrb[0].mxu0 %v1511
  %v1547 = vpop.f32.mrb[0].mxu0
  %v1548 = vadd.f32 0.0, %v1547
  %v1549 = vpop.f32.mrb[0].mxu0
  %v1550 = vpop.f32.mrb[0].mxu0
  %v1551 = vadd.f32 0.0, %v1550
  %v1552 = vpop.f32.mrb[0].mxu0
  %1553 = vdwg.mxu0
  %v1554 = vadd.f32 %v1424, %v1548
  %v1555 = vadd.f32 %v1427, %v1551
  %v1556 = vmul.f32 %v1172, %v646
  %v1557 = vmul.f32 %v1175, %v646
  %v1558 = vpack.c.bf16 %v1557, %v1556
  %1560 = vrot.lane.b32.xlu0 %v1558, 96
  %v1561 = vpop.permute.xlu0 %1560
  %v1563 = vsel %vm116, %v1561, 0
  %1565 = vmatprep.subr.bf16.mxu0 0
  %1566 = vmatpush1.bf16.xpose.msra.mxu0 %v1563
  %1567 = vmatprep.subr.bf16.mxu0 0
  %1568 = vmatpush1.bf16.xpose.msra.mxu0 0
  %1569 = vmatprep.subr.bf16.mxu0 0
  %1570 = vmatpush1.bf16.xpose.msra.mxu0 0
  %1571 = vmatprep.subr.bf16.mxu0 0
  %1572 = vmatpush1.bf16.xpose.msra.mxu0 0
  %1573 = vmatprep.subr.bf16.mxu0 0
  %1574 = vmatpush1.bf16.xpose.msra.mxu0 0
  %1575 = vmatprep.subr.bf16.mxu0 0
  %1576 = vmatpush1.bf16.xpose.msra.mxu0 0
  %1577 = vmatprep.subr.bf16.mxu0 0
  %1578 = vmatpush1.bf16.xpose.msra.mxu0 0
  %1579 = vmatprep.subr.bf16.mxu0 0
  %1580 = vmatpush1.bf16.xpose.msra.mxu0 0
  %1581 = vmatprep.subr.bf16.mxu0 0
  %1582 = vmatpush1.bf16.xpose.msra.mxu0 0
  %1583 = vmatprep.subr.bf16.mxu0 0
  %1584 = vmatpush1.bf16.xpose.msra.mxu0 0
  %1585 = vmatprep.subr.bf16.mxu0 0
  %1586 = vmatpush1.bf16.xpose.msra.mxu0 0
  %1587 = vmatprep.subr.bf16.mxu0 0
  %1588 = vmatpush1.bf16.xpose.msra.mxu0 0
  %1589 = vmatprep.subr.bf16.mxu0 0
  %1590 = vmatpush1.bf16.xpose.msra.mxu0 0
  %1591 = vmatprep.subr.bf16.mxu0 0
  %1592 = vmatpush1.bf16.xpose.msra.mxu0 0
  %1593 = vmatprep.subr.bf16.mxu0 0
  %1594 = vmatpush1.bf16.xpose.msra.mxu0 0
  %1595 = vmatprep.subr.bf16.mxu0 0
  %1596 = vmatpush1.bf16.xpose.msra.mxu0 0
  %1597 = vmatprep.mubr.bf16.mxu0 0
  %1598 = vmatmul.mubr.bf16.gmra.mrb[0].mxu0 %v1186
  %v1599 = vpop.f32.mrb[0].mxu0
  %v1600 = vadd.f32 %v106, %v1599
  %v1601 = vpop.f32.mrb[0].mxu0
  %v1602 = vpop.f32.mrb[0].mxu0
  %v1603 = vadd.f32 %v107, %v1602
  %v1604 = vpop.f32.mrb[0].mxu0
  %1605 = vdwg.mxu0
  %v1606 = vsel %vm290, %v1600, -inf
  %1607 = vmax.xlane.f32.xlu0 %v1606
  %v1608 = vpop.xlane.xlu0 %1607
  %v1609 = vsel %vm290, %v1603, -inf
  %1610 = vmax.xlane.f32.xlu0 %v1609
  %v1611 = vpop.xlane.xlu0 %1610
  %v1612 = vsub.f32 %v1600, %v1608
  %v1613 = vsub.f32 %v1603, %v1611
  %v1614 = vmul.f32 %v1612, 1.442695
  %v1615 = vpow.pop %v1614
  %v1616 = vmul.f32 %v1613, 1.442695
  %v1617 = vpow.pop %v1616
  %v1618 = vsel %vm290, %v1615, 0.0
  %1619 = vadd.xlane.f32.xlu0 %v1618
  %v1620 = vpop.xlane.xlu0 %1619
  %v1621 = vsel %vm290, %v1617, 0.0
  %1622 = vadd.xlane.f32.xlu0 %v1621
  %v1623 = vpop.xlane.xlu0 %1622
  %v1624 = vrcp.pop %v1620
  %v1625 = vrcp.pop %v1623
  %v1626 = vmul.f32 %v1615, %v1624
  %v1627 = vmul.f32 %v1617, %v1625
  %v1628 = vpack.c.bf16 %v1627, %v1626
  %v1629 = vmul.f32 %v1172, %v722
  %v1630 = vmul.f32 %v1175, %v722
  %v1631 = vpack.c.bf16 %v1630, %v1629
  %1633 = vrot.lane.b32.xlu0 %v1631, 64
  %v1634 = vpop.permute.xlu0 %1633
  %v1637 = vsel %vm290, %v1628, 0
  %1639 = vmatprep.subr.bf16.mxu0 0
  %1640 = vmatpush1.bf16.msra.mxu0 %v1634
  %1641 = vmatprep.subr.bf16.mxu0 0
  %1642 = vmatpush1.bf16.msra.mxu0 0
  %1643 = vmatprep.subr.bf16.mxu0 0
  %1644 = vmatpush1.bf16.msra.mxu0 0
  %1645 = vmatprep.subr.bf16.mxu0 0
  %1646 = vmatpush1.bf16.msra.mxu0 0
  %1647 = vmatprep.subr.bf16.mxu0 0
  %1648 = vmatpush1.bf16.msra.mxu0 0
  %1649 = vmatprep.subr.bf16.mxu0 0
  %1650 = vmatpush1.bf16.msra.mxu0 0
  %1651 = vmatprep.subr.bf16.mxu0 0
  %1652 = vmatpush1.bf16.msra.mxu0 0
  %1653 = vmatprep.subr.bf16.mxu0 0
  %1654 = vmatpush1.bf16.msra.mxu0 0
  %1655 = vmatprep.subr.bf16.mxu0 0
  %1656 = vmatpush1.bf16.msra.mxu0 0
  %1657 = vmatprep.subr.bf16.mxu0 0
  %1658 = vmatpush1.bf16.msra.mxu0 0
  %1659 = vmatprep.subr.bf16.mxu0 0
  %1660 = vmatpush1.bf16.msra.mxu0 0
  %1661 = vmatprep.subr.bf16.mxu0 0
  %1662 = vmatpush1.bf16.msra.mxu0 0
  %1663 = vmatprep.subr.bf16.mxu0 0
  %1664 = vmatpush1.bf16.msra.mxu0 0
  %1665 = vmatprep.subr.bf16.mxu0 0
  %1666 = vmatpush1.bf16.msra.mxu0 0
  %1667 = vmatprep.subr.bf16.mxu0 0
  %1668 = vmatpush1.bf16.msra.mxu0 0
  %1669 = vmatprep.subr.bf16.mxu0 0
  %1670 = vmatpush1.bf16.msra.mxu0 0
  %1671 = vmatprep.mubr.bf16.mxu0 0
  %1672 = vmatmul.mubr.bf16.gmra.mrb[0].mxu0 %v1637
  %v1673 = vpop.f32.mrb[0].mxu0
  %v1674 = vadd.f32 0.0, %v1673
  %v1675 = vpop.f32.mrb[0].mxu0
  %v1676 = vpop.f32.mrb[0].mxu0
  %v1677 = vadd.f32 0.0, %v1676
  %v1678 = vpop.f32.mrb[0].mxu0
  %1679 = vdwg.mxu0
  %v1680 = vadd.f32 %v1554, %v1674
  %v1681 = vadd.f32 %v1555, %v1677
  %v1682 = vpack.c.bf16 %v1681, %v1680
  %s1683 = scalar_lea.vmem %s9, 16
  %v1684 = vld [vmem:[%s1683] sm:$0xf]
  %v1685 = vld [vmem:[%s1683 + $0x4] sm:$0xf]
  %v1686 = vld [vmem:[%s1683 + $0x8] sm:$0xf]
  %v1687 = vld [vmem:[%s1683 + $0xc] sm:$0xf]
  %s1688 = scalar_lea.vmem %s10, 1
  %v1689 = vld [vmem:[%s1688] sm:$0x1]
  %v1691 = vlaneseq
  %v1692 = vshrl.u32 %v1691, 7
  %v1693 = vsub.s32 0, %v1692
  %v1694 = vrot.slane %v1689, %v1693
  %v1700 = vunpack.c.l.b16 %v1684
  %v1701 = vunpack.c.l.b16 %v1685
  %v1702 = vunpack.c.l.b16 %v1686
  %v1703 = vunpack.c.l.b16 %v1687
  %v1704 = vpack.c.b16 %v1701, %v1700
  %v1705 = vpack.c.b16 %v1703, %v1702
  %v1709 = vsel %vm116, %v1682, 0
  %1711 = vmatprep.subr.bf16.mxu0 0
  %1712 = vmatpush1.bf16.msra.mxu0 %v1704
  %1713 = vmatprep.subr.bf16.mxu0 0
  %1714 = vmatpush1.bf16.msra.mxu0 %v1705
  %1715 = vmatprep.subr.bf16.mxu0 0
  %1716 = vmatpush1.bf16.msra.mxu0 0
  %1717 = vmatprep.subr.bf16.mxu0 0
  %1718 = vmatpush1.bf16.msra.mxu0 0
  %1719 = vmatprep.subr.bf16.mxu0 0
  %1720 = vmatpush1.bf16.msra.mxu0 0
  %1721 = vmatprep.subr.bf16.mxu0 0
  %1722 = vmatpush1.bf16.msra.mxu0 0
  %1723 = vmatprep.subr.bf16.mxu0 0
  %1724 = vmatpush1.bf16.msra.mxu0 0
  %1725 = vmatprep.subr.bf16.mxu0 0
  %1726 = vmatpush1.bf16.msra.mxu0 0
  %1727 = vmatprep.subr.bf16.mxu0 0
  %1728 = vmatpush1.bf16.msra.mxu0 0
  %1729 = vmatprep.subr.bf16.mxu0 0
  %1730 = vmatpush1.bf16.msra.mxu0 0
  %1731 = vmatprep.subr.bf16.mxu0 0
  %1732 = vmatpush1.bf16.msra.mxu0 0
  %1733 = vmatprep.subr.bf16.mxu0 0
  %1734 = vmatpush1.bf16.msra.mxu0 0
  %1735 = vmatprep.subr.bf16.mxu0 0
  %1736 = vmatpush1.bf16.msra.mxu0 0
  %1737 = vmatprep.subr.bf16.mxu0 0
  %1738 = vmatpush1.bf16.msra.mxu0 0
  %1739 = vmatprep.subr.bf16.mxu0 0
  %1740 = vmatpush1.bf16.msra.mxu0 0
  %1741 = vmatprep.subr.bf16.mxu0 0
  %1742 = vmatpush1.bf16.msra.mxu0 0
  %1743 = vmatprep.mubr.bf16.mxu0 0
  %1744 = vmatmul.mubr.bf16.gmra.mrb[0].mxu0 %v1709
  %v1745 = vpop.f32.mrb[0].mxu0
  %v1746 = vadd.f32 %v1694, %v1745
  %v1747 = vpop.f32.mrb[0].mxu0
  %v1748 = vpop.f32.mrb[0].mxu0
  %v1749 = vadd.f32 %v1694, %v1748
  %v1750 = vpop.f32.mrb[0].mxu0
  %1751 = vdwg.mxu0
  %v1752 = vadd.f32 %v1746, %v1106
  %v1753 = vadd.f32 %v1749, %v1107
  %s1754 = scalar_lea.vmem %s11, 1
  %v1755 = vld [vmem:[%s1754] sm:$0x1]
  %s1756 = scalar_lea.vmem %s12, 1
  %v1757 = vld [vmem:[%s1756] sm:$0x1]
  %v1758 = vsel %vm116, %v1752, 0.0
  %1759 = vadd.xlane.f32.xlu0 %v1758
  %v1760 = vpop.xlane.xlu0 %1759
  %v1761 = vsel %vm116, %v1753, 0.0
  %1762 = vadd.xlane.f32.xlu0 %v1761
  %v1763 = vpop.xlane.xlu0 %1762
  %v1764 = vmul.f32 %v1760, %v123
  %v1765 = vmul.f32 %v1763, %v123
  %v1766 = vsub.f32 %v1752, %v1764
  %v1767 = vsub.f32 %v1753, %v1765
  %v1768 = vmul.f32 %v1766, %v1766
  %v1769 = vmul.f32 %v1767, %v1767
  %v1770 = vsel %vm116, %v1768, 0.0
  %1771 = vadd.xlane.f32.xlu0 %v1770
  %v1772 = vpop.xlane.xlu0 %1771
  %v1773 = vsel %vm116, %v1769, 0.0
  %1774 = vadd.xlane.f32.xlu0 %v1773
  %v1775 = vpop.xlane.xlu0 %1774
  %v1776 = vmul.f32 %v1772, %v123
  %v1777 = vmul.f32 %v1775, %v123
  %v1778 = vadd.f32 %v1776, 1e-12
  %v1779 = vadd.f32 %v1777, 1e-12
  %v1780 = vrsqrt.pop %v1778
  %v1781 = vrsqrt.pop %v1779
  %v1782 = vmul.f32 %v1766, %v1780
  %v1783 = vmul.f32 %v1767, %v1781
  %v1785 = vlaneseq
  %v1786 = vshrl.u32 %v1785, 7
  %v1787 = vsub.s32 0, %v1786
  %v1788 = vrot.slane %v1755, %v1787
  %v1790 = vmul.f32 %v1782, %v1788
  %v1791 = vmul.f32 %v1783, %v1788
  %v1793 = vlaneseq
  %v1794 = vshrl.u32 %v1793, 7
  %v1795 = vsub.s32 0, %v1794
  %v1796 = vrot.slane %v1757, %v1795
  %v1798 = vadd.f32 %v1790, %v1796
  %v1799 = vadd.f32 %v1791, %v1796
  %v1800 = vpack.c.bf16 %v1799, %v1798
  %s1801 = scalar_lea.vmem %s13, 16
  %v1802 = vld [vmem:[%s1801] sm:$0xf]
  %v1803 = vld [vmem:[%s1801 + $0x4] sm:$0xf]
  %v1804 = vld [vmem:[%s1801 + $0x8] sm:$0xf]
  %v1805 = vld [vmem:[%s1801 + $0xc] sm:$0xf]
  %s1806 = scalar_lea.vmem %s14, 1
  %v1807 = vld [vmem:[%s1806] sm:$0x1]
  %v1809 = vlaneseq
  %v1810 = vshrl.u32 %v1809, 7
  %v1811 = vsub.s32 0, %v1810
  %v1812 = vrot.slane %v1807, %v1811
  %v1818 = vunpack.c.l.b16 %v1802
  %v1819 = vunpack.c.l.b16 %v1803
  %v1820 = vunpack.c.l.b16 %v1804
  %v1821 = vunpack.c.l.b16 %v1805
  %v1822 = vpack.c.b16 %v1819, %v1818
  %v1823 = vpack.c.b16 %v1821, %v1820
  %v1827 = vsel %vm116, %v1800, 0
  %1829 = vmatprep.subr.bf16.mxu0 0
  %1830 = vmatpush1.bf16.msra.mxu0 %v1822
  %1831 = vmatprep.subr.bf16.mxu0 0
  %1832 = vmatpush1.bf16.msra.mxu0 %v1823
  %1833 = vmatprep.subr.bf16.mxu0 0
  %1834 = vmatpush1.bf16.msra.mxu0 0
  %1835 = vmatprep.subr.bf16.mxu0 0
  %1836 = vmatpush1.bf16.msra.mxu0 0
  %1837 = vmatprep.subr.bf16.mxu0 0
  %1838 = vmatpush1.bf16.msra.mxu0 0
  %1839 = vmatprep.subr.bf16.mxu0 0
  %1840 = vmatpush1.bf16.msra.mxu0 0
  %1841 = vmatprep.subr.bf16.mxu0 0
  %1842 = vmatpush1.bf16.msra.mxu0 0
  %1843 = vmatprep.subr.bf16.mxu0 0
  %1844 = vmatpush1.bf16.msra.mxu0 0
  %1845 = vmatprep.subr.bf16.mxu0 0
  %1846 = vmatpush1.bf16.msra.mxu0 0
  %1847 = vmatprep.subr.bf16.mxu0 0
  %1848 = vmatpush1.bf16.msra.mxu0 0
  %1849 = vmatprep.subr.bf16.mxu0 0
  %1850 = vmatpush1.bf16.msra.mxu0 0
  %1851 = vmatprep.subr.bf16.mxu0 0
  %1852 = vmatpush1.bf16.msra.mxu0 0
  %1853 = vmatprep.subr.bf16.mxu0 0
  %1854 = vmatpush1.bf16.msra.mxu0 0
  %1855 = vmatprep.subr.bf16.mxu0 0
  %1856 = vmatpush1.bf16.msra.mxu0 0
  %1857 = vmatprep.subr.bf16.mxu0 0
  %1858 = vmatpush1.bf16.msra.mxu0 0
  %1859 = vmatprep.subr.bf16.mxu0 0
  %1860 = vmatpush1.bf16.msra.mxu0 0
  %1861 = vmatprep.mubr.bf16.mxu0 0
  %1862 = vmatmul.mubr.bf16.gmra.mrb[0].mxu0 %v1827
  %v1863 = vpop.f32.mrb[0].mxu0
  %v1864 = vadd.f32 %v1812, %v1863
  %v1865 = vpop.f32.mrb[0].mxu0
  %v1866 = vpop.f32.mrb[0].mxu0
  %v1867 = vadd.f32 %v1812, %v1866
  %v1868 = vpop.f32.mrb[0].mxu0
  %1869 = vdwg.mxu0
  %v1870 = vmul.f32 %v1864, 0.5
  %v1871 = vmul.f32 %v1867, 0.5
  %v1872 = vmul.f32 %v1864, 0.044715
  %v1873 = vmul.f32 %v1867, 0.044715
  %v1874 = vmul.f32 %v1872, %v1864
  %v1875 = vmul.f32 %v1873, %v1867
  %v1876 = vmul.f32 %v1874, %v1864
  %v1877 = vmul.f32 %v1875, %v1867
  %v1878 = vadd.f32 %v1864, %v1876
  %v1879 = vadd.f32 %v1867, %v1877
  %v1880 = vmul.f32 %v1878, 0.7978846
  %v1881 = vmul.f32 %v1879, 0.7978846
  %v1882 = vtanh.pop %v1880
  %v1883 = vtanh.pop %v1881
  %v1884 = vadd.f32 %v1882, 1.0
  %v1885 = vadd.f32 %v1883, 1.0
  %v1886 = vmul.f32 %v1870, %v1884
  %v1887 = vmul.f32 %v1871, %v1885
  %v1888 = vpack.c.bf16 %v1887, %v1886
  %s1889 = scalar_lea.vmem %s15, 32
  %v1890 = vld [vmem:[%s1889] sm:$0xf]
  %v1891 = vld [vmem:[%s1889 + $0x4] sm:$0xf]
  %v1892 = vld [vmem:[%s1889 + $0x8] sm:$0xf]
  %v1893 = vld [vmem:[%s1889 + $0xc] sm:$0xf]
  %v1894 = vld [vmem:[%s1889 + $0x10] sm:$0xf]
  %v1895 = vld [vmem:[%s1889 + $0x14] sm:$0xf]
  %v1896 = vld [vmem:[%s1889 + $0x18] sm:$0xf]
  %v1897 = vld [vmem:[%s1889 + $0x1c] sm:$0xf]
  %s1898 = scalar_lea.vmem %s16, 1
  %v1899 = vld [vmem:[%s1898] sm:$0x1]
  %v1901 = vlaneseq
  %v1902 = vshrl.u32 %v1901, 7
  %v1903 = vsub.s32 0, %v1902
  %v1904 = vrot.slane %v1899, %v1903
  %v1914 = vunpack.c.l.b16 %v1890
  %v1915 = vunpack.c.l.b16 %v1891
  %v1916 = vunpack.c.l.b16 %v1892
  %v1917 = vunpack.c.l.b16 %v1893
  %v1918 = vunpack.c.l.b16 %v1894
  %v1919 = vunpack.c.l.b16 %v1895
  %v1920 = vunpack.c.l.b16 %v1896
  %v1921 = vunpack.c.l.b16 %v1897
  %v1922 = vpack.c.b16 %v1915, %v1914
  %v1923 = vpack.c.b16 %v1917, %v1916
  %v1924 = vpack.c.b16 %v1919, %v1918
  %v1925 = vpack.c.b16 %v1921, %v1920
  %v1931 = vsel %vm1017, %v1888, 0
  %1933 = vmatprep.subr.bf16.mxu0 0
  %1934 = vmatpush1.bf16.msra.mxu0 %v1922
  %1935 = vmatprep.subr.bf16.mxu0 0
  %1936 = vmatpush1.bf16.msra.mxu0 %v1923
  %1937 = vmatprep.subr.bf16.mxu0 0
  %1938 = vmatpush1.bf16.msra.mxu0 %v1924
  %1939 = vmatprep.subr.bf16.mxu0 0
  %1940 = vmatpush1.bf16.msra.mxu0 %v1925
  %1941 = vmatprep.subr.bf16.mxu0 0
  %1942 = vmatpush1.bf16.msra.mxu0 0
  %1943 = vmatprep.subr.bf16.mxu0 0
  %1944 = vmatpush1.bf16.msra.mxu0 0
  %1945 = vmatprep.subr.bf16.mxu0 0
  %1946 = vmatpush1.bf16.msra.mxu0 0
  %1947 = vmatprep.subr.bf16.mxu0 0
  %1948 = vmatpush1.bf16.msra.mxu0 0
  %1949 = vmatprep.subr.bf16.mxu0 0
  %1950 = vmatpush1.bf16.msra.mxu0 0
  %1951 = vmatprep.subr.bf16.mxu0 0
  %1952 = vmatpush1.bf16.msra.mxu0 0
  %1953 = vmatprep.subr.bf16.mxu0 0
  %1954 = vmatpush1.bf16.msra.mxu0 0
  %1955 = vmatprep.subr.bf16.mxu0 0
  %1956 = vmatpush1.bf16.msra.mxu0 0
  %1957 = vmatprep.subr.bf16.mxu0 0
  %1958 = vmatpush1.bf16.msra.mxu0 0
  %1959 = vmatprep.subr.bf16.mxu0 0
  %1960 = vmatpush1.bf16.msra.mxu0 0
  %1961 = vmatprep.subr.bf16.mxu0 0
  %1962 = vmatpush1.bf16.msra.mxu0 0
  %1963 = vmatprep.subr.bf16.mxu0 0
  %1964 = vmatpush1.bf16.msra.mxu0 0
  %1965 = vmatprep.mubr.bf16.mxu0 0
  %1966 = vmatmul.mubr.bf16.gmra.mrb[0].mxu0 %v1931
  %v1967 = vpop.f32.mrb[0].mxu0
  %v1968 = vadd.f32 %v1904, %v1967
  %v1969 = vpop.f32.mrb[0].mxu0
  %v1970 = vpop.f32.mrb[0].mxu0
  %v1971 = vadd.f32 %v1904, %v1970
  %v1972 = vpop.f32.mrb[0].mxu0
  %1973 = vdwg.mxu0
  %v1974 = vadd.f32 %v1968, %v1798
  %v1975 = vadd.f32 %v1971, %v1799
  %s1976 = scalar_lea.vmem %s17, 1
  %v1977 = vld [vmem:[%s1976] sm:$0x1]
  %s1978 = scalar_lea.vmem %s18, 1
  %v1979 = vld [vmem:[%s1978] sm:$0x1]
  %v1980 = vsel %vm116, %v1974, 0.0
  %1981 = vadd.xlane.f32.xlu0 %v1980
  %v1982 = vpop.xlane.xlu0 %1981
  %v1983 = vsel %vm116, %v1975, 0.0
  %1984 = vadd.xlane.f32.xlu0 %v1983
  %v1985 = vpop.xlane.xlu0 %1984
  %v1986 = vmul.f32 %v1982, %v123
  %v1987 = vmul.f32 %v1985, %v123
  %v1988 = vsub.f32 %v1974, %v1986
  %v1989 = vsub.f32 %v1975, %v1987
  %v1990 = vmul.f32 %v1988, %v1988
  %v1991 = vmul.f32 %v1989, %v1989
  %v1992 = vsel %vm116, %v1990, 0.0
  %1993 = vadd.xlane.f32.xlu0 %v1992
  %v1994 = vpop.xlane.xlu0 %1993
  %v1995 = vsel %vm116, %v1991, 0.0
  %1996 = vadd.xlane.f32.xlu0 %v1995
  %v1997 = vpop.xlane.xlu0 %1996
  %v1998 = vmul.f32 %v1994, %v123
  %v1999 = vmul.f32 %v1997, %v123
  %v2000 = vadd.f32 %v1998, 1e-12
  %v2001 = vadd.f32 %v1999, 1e-12
  %v2002 = vrsqrt.pop %v2000
  %v2003 = vrsqrt.pop %v2001
  %v2004 = vmul.f32 %v1988, %v2002
  %v2005 = vmul.f32 %v1989, %v2003
  %v2007 = vlaneseq
  %v2008 = vshrl.u32 %v2007, 7
  %v2009 = vsub.s32 0, %v2008
  %v2010 = vrot.slane %v1977, %v2009
  %v2012 = vmul.f32 %v2004, %v2010
  %v2013 = vmul.f32 %v2005, %v2010
  %v2015 = vlaneseq
  %v2016 = vshrl.u32 %v2015, 7
  %v2017 = vsub.s32 0, %v2016
  %v2018 = vrot.slane %v1979, %v2017
  %v2020 = vadd.f32 %v2012, %v2018
  %v2021 = vadd.f32 %v2013, %v2018
  %v2022 = vpack.c.bf16 %v2021, %v2020
  %v2023 = vld [vmem:[%s19] sm:$0xf]
  %v2024 = vld [vmem:[%s19 + $0x4] sm:$0xf]
  %v2025 = vld [vmem:[%s19 + $0x8] sm:$0xf]
  %v2026 = vld [vmem:[%s19 + $0xc] sm:$0xf]
  %v2027 = vld [vmem:[%s20] sm:$0x1]
  %v2029 = vlaneseq
  %v2030 = vshrl.u32 %v2029, 7
  %v2031 = vsub.s32 0, %v2030
  %v2032 = vrot.slane %v2027, %v2031
  %v2038 = vunpack.c.l.b16 %v2023
  %v2039 = vunpack.c.l.b16 %v2024
  %v2040 = vunpack.c.l.b16 %v2025
  %v2041 = vunpack.c.l.b16 %v2026
  %v2042 = vpack.c.b16 %v2039, %v2038
  %v2043 = vpack.c.b16 %v2041, %v2040
  %v2047 = vsel %vm116, %v2022, 0
  %2049 = vmatprep.subr.bf16.mxu0 0
  %2050 = vmatpush1.bf16.msra.mxu0 %v2042
  %2051 = vmatprep.subr.bf16.mxu0 0
  %2052 = vmatpush1.bf16.msra.mxu0 %v2043
  %2053 = vmatprep.subr.bf16.mxu0 0
  %2054 = vmatpush1.bf16.msra.mxu0 0
  %2055 = vmatprep.subr.bf16.mxu0 0
  %2056 = vmatpush1.bf16.msra.mxu0 0
  %2057 = vmatprep.subr.bf16.mxu0 0
  %2058 = vmatpush1.bf16.msra.mxu0 0
  %2059 = vmatprep.subr.bf16.mxu0 0
  %2060 = vmatpush1.bf16.msra.mxu0 0
  %2061 = vmatprep.subr.bf16.mxu0 0
  %2062 = vmatpush1.bf16.msra.mxu0 0
  %2063 = vmatprep.subr.bf16.mxu0 0
  %2064 = vmatpush1.bf16.msra.mxu0 0
  %2065 = vmatprep.subr.bf16.mxu0 0
  %2066 = vmatpush1.bf16.msra.mxu0 0
  %2067 = vmatprep.subr.bf16.mxu0 0
  %2068 = vmatpush1.bf16.msra.mxu0 0
  %2069 = vmatprep.subr.bf16.mxu0 0
  %2070 = vmatpush1.bf16.msra.mxu0 0
  %2071 = vmatprep.subr.bf16.mxu0 0
  %2072 = vmatpush1.bf16.msra.mxu0 0
  %2073 = vmatprep.subr.bf16.mxu0 0
  %2074 = vmatpush1.bf16.msra.mxu0 0
  %2075 = vmatprep.subr.bf16.mxu0 0
  %2076 = vmatpush1.bf16.msra.mxu0 0
  %2077 = vmatprep.subr.bf16.mxu0 0
  %2078 = vmatpush1.bf16.msra.mxu0 0
  %2079 = vmatprep.subr.bf16.mxu0 0
  %2080 = vmatpush1.bf16.msra.mxu0 0
  %2081 = vmatprep.mubr.bf16.mxu0 0
  %2082 = vmatmul.mubr.bf16.gmra.mrb[0].mxu0 %v2047
  %v2083 = vpop.f32.mrb[0].mxu0
  %v2084 = vadd.f32 %v2032, %v2083
  %v2085 = vpop.f32.mrb[0].mxu0
  %v2086 = vpop.f32.mrb[0].mxu0
  %v2087 = vadd.f32 %v2032, %v2086
  %v2088 = vpop.f32.mrb[0].mxu0
  %2089 = vdwg.mxu0
  %v2090 = vtanh.pop %v2084
  %v2091 = vtanh.pop %v2087
  %v2092 = vpack.c.bf16 %v2091, %v2090
  %v2093 = vld [vmem:[%s21] sm:$0xf]
  %v2094 = vld [vmem:[%s21 + $0x4] sm:$0xf]
  %v2095 = vld [vmem:[%s21 + $0x8] sm:$0xf]
  %v2096 = vld [vmem:[%s21 + $0xc] sm:$0xf]
  %v2097 = vld [vmem:[%s22] sm:$0x1]
  %v2099 = vlaneseq
  %v2100 = vshrl.u32 %v2099, 7
  %v2101 = vsub.s32 0, %v2100
  %v2102 = vrot.slane %v2097, %v2101
  %v2108 = vunpack.c.l.b16 %v2093
  %v2109 = vunpack.c.l.b16 %v2094
  %v2110 = vunpack.c.l.b16 %v2095
  %v2111 = vunpack.c.l.b16 %v2096
  %v2112 = vpack.c.b16 %v2109, %v2108
  %v2113 = vpack.c.b16 %v2111, %v2110
  %v2117 = vsel %vm116, %v2092, 0
  %2119 = vmatprep.subr.bf16.mxu0 0
  %2120 = vmatpush1.bf16.msra.mxu0 %v2112
  %2121 = vmatprep.subr.bf16.mxu0 0
  %2122 = vmatpush1.bf16.msra.mxu0 %v2113
  %2123 = vmatprep.subr.bf16.mxu0 0
  %2124 = vmatpush1.bf16.msra.mxu0 0
  %2125 = vmatprep.subr.bf16.mxu0 0
  %2126 = vmatpush1.bf16.msra.mxu0 0
  %2127 = vmatprep.subr.bf16.mxu0 0
  %2128 = vmatpush1.bf16.msra.mxu0 0
  %2129 = vmatprep.subr.bf16.mxu0 0
  %2130 = vmatpush1.bf16.msra.mxu0 0
  %2131 = vmatprep.subr.bf16.mxu0 0
  %2132 = vmatpush1.bf16.msra.mxu0 0
  %2133 = vmatprep.subr.bf16.mxu0 0
  %2134 = vmatpush1.bf16.msra.mxu0 0
  %2135 = vmatprep.subr.bf16.mxu0 0
  %2136 = vmatpush1.bf16.msra.mxu0 0
  %2137 = vmatprep.subr.bf16.mxu0 0
  %2138 = vmatpush1.bf16.msra.mxu0 0
  %2139 = vmatprep.subr.bf16.mxu0 0
  %2140 = vmatpush1.bf16.msra.mxu0 0
  %2141 = vmatprep.subr.bf16.mxu0 0
  %2142 = vmatpush1.bf16.msra.mxu0 0
  %2143 = vmatprep.subr.bf16.mxu0 0
  %2144 = vmatpush1.bf16.msra.mxu0 0
  %2145 = vmatprep.subr.bf16.mxu0 0
  %2146 = vmatpush1.bf16.msra.mxu0 0
  %2147 = vmatprep.subr.bf16.mxu0 0
  %2148 = vmatpush1.bf16.msra.mxu0 0
  %2149 = vmatprep.subr.bf16.mxu0 0
  %2150 = vmatpush1.bf16.msra.mxu0 0
  %2151 = vmatprep.mubr.bf16.mxu0 0
  %2152 = vmatmul.mubr.bf16.gmra.mrb[0].mxu0 %v2117
  %v2153 = vpop.f32.mrb[0].mxu0
  %v2154 = vadd.f32 %v2102, %v2153
  %v2155 = vpop.f32.mrb[0].mxu0
  %v2156 = vpop.f32.mrb[0].mxu0
  %v2157 = vadd.f32 %v2102, %v2156
  %v2158 = vpop.f32.mrb[0].mxu0
  %2159 = vdwg.mxu0
  %2160 = vst [vmem:[%s23] sm:$0xff] %v2154
  %2161 = vst [vmem:[%s23 + $0x8] sm:$0xff] %v2157
  // Predicated region
  $region94: #{_lambda_.1} parent=0 // pred_check
    _
  $region95: #{_lambda_.1} parent=0 // pred_check_branch
    %2163 = sbr.rel (0) target = $region97
  $region96: #{_lambda_.1} parent=0 // pred_region
    _
  $region97: #{_lambda_.1} parent=0 // pred_fallthru
    _
  // Predicated region
  $region98: #{_lambda_.1} parent=0 // pred_check
    _
  $region99: #{_lambda_.1} parent=0 // pred_check_branch
    %2165 = sbr.rel (0) target = $region101
  $region100: #{_lambda_.1} parent=0 // pred_region
    _
  $region101: #{_lambda_.1} parent=0 // pred_fallthru
    _

</llo_original>
